<compile_context>
chip_gen: v7x
topology: tpu7x:2x2x1
jax: 0.10.0
libtpu: 0.0.40
codegen_flags: <defaults>
</compile_context>

<pallas_src>
import jax
import jax.numpy as jnp
from jax import lax
from jax.experimental import pallas as pl
from jax.experimental.pallas import tpu as pltpu


N_KERNELS = 5
MUL_FACTOR = 2.0   # the repeated-squaring exp chain below relies on mul_factor == 2
TILE = 256         # output tile edge: MXU-friendly on v6e/v7x (256) and v5e (mult of 128)


def _rbf_tile_kernel(scale_ref, xr_ref, xc_ref, sqr_ref, sqc_ref, out_ref):
    """Compute one (TILE, TILE) tile of sum_k exp(-L2 / (bw * mult_k)).

    scale_ref : (1,)      f32 SMEM   -1 / (bw * max_multiplier)
    xr_ref    : (TILE, D) f32 VMEM   row block of centered X
    xc_ref    : (TILE, D) f32 VMEM   col block of centered X
    sqr_ref   : (TILE, 1) f32 VMEM   row squared norms
    sqc_ref   : (1, TILE) f32 VMEM   col squared norms
    """
    # Gram tile on the MXU, contracting the feature dim of both blocks directly
    # (no explicit transpose of the column block).
    gram = lax.dot_general(
        xr_ref[...], xc_ref[...],
        dimension_numbers=(((1,), (1,)), ((), ())),
        preferred_element_type=jnp.float32)                      # (TILE, TILE)

    # Squared pairwise distances: ||a||^2 + ||b||^2 - 2 a.b, clamped at 0.
    l2 = jnp.maximum(sqr_ref[...] + sqc_ref[...] - 2.0 * gram, 0.0)

    # Single EUP exp per element for the LARGEST bandwidth multiplier; since the
    # multipliers are 2**(k - n//2), every other kernel term is an integer power
    # of `base` whose exponent doubles as the multiplier halves -> pure VPU work.
    base = jnp.exp(l2 * scale_ref[0])
    acc = base
    term = base
    for _ in range(N_KERNELS - 1):
        term = term * term
        acc = acc + term
    out_ref[...] = acc


def rbf_forward(x, bandwidth=None):
    """x: (N, D) -> (N, N) multi-bandwidth RBF kernel matrix (float32)."""
    assert MUL_FACTOR == 2.0, "exp repeated-squaring chain assumes mul_factor == 2"
    x = x.astype(jnp.float32)
    n, d = x.shape

    # Center X: pairwise distances are translation invariant, and centering keeps
    # the f32 expansion well conditioned. Also gives the closed-form bandwidth.
    xc = x - jnp.mean(x, axis=0, keepdims=True)
    if bandwidth is None:
        l2_sum = 2.0 * jnp.float32(n) * jnp.sum(xc * xc)   # == sum_ij ||xi - xj||^2
        bw = l2_sum / jnp.float32(n * n - n)
    else:
        bw = jnp.float32(bandwidth)

    # Largest bandwidth multiplier: mul_factor ** (n_kernels - 1 - n_kernels // 2).
    max_mult = jnp.float32(MUL_FACTOR ** (N_KERNELS - 1 - N_KERNELS // 2))
    scale = jnp.reshape(-1.0 / (bw * max_mult), (1,)).astype(jnp.float32)

    # Pad N up to a multiple of TILE so output tiles are lane-dense (multiple of 128)
    # and MXU-sized; padded rows are zeros and are sliced away at the end.
    n_pad = ((n + TILE - 1) // TILE) * TILE
    xp = jnp.pad(xc, ((0, n_pad - n), (0, 0)))

    # Row / column squared norms, computed once (O(N*D)) and streamed per tile.
    sq = jnp.sum(xp * xp, axis=-1)
    sq_row = sq[:, None]     # (n_pad, 1)
    sq_col = sq[None, :]     # (1, n_pad)

    grid = (n_pad // TILE, n_pad // TILE)
    out = pl.pallas_call(
        _rbf_tile_kernel,
        out_shape=jax.ShapeDtypeStruct((n_pad, n_pad), jnp.float32),
        grid=grid,
        in_specs=[
            pl.BlockSpec(memory_space=pltpu.MemorySpace.SMEM),        # scale scalar
            pl.BlockSpec((TILE, d), lambda i, j: (i, 0)),             # X row block
            pl.BlockSpec((TILE, d), lambda i, j: (j, 0)),             # X col block
            pl.BlockSpec((TILE, 1), lambda i, j: (i, 0)),             # row norms
            pl.BlockSpec((1, TILE), lambda i, j: (0, j)),             # col norms
        ],
        out_specs=pl.BlockSpec((TILE, TILE), lambda i, j: (i, j)),
        compiler_params=pltpu.CompilerParams(
            dimension_semantics=("parallel", "parallel")),
    )(scale, xp, xp, sq_row, sq_col)

    return out[:n, :n]


def _rbf_reference(x):
    """Pure-JAX reference matching the PyTorch module semantics."""
    x = x.astype(jnp.float32)
    diff = x[:, None, :] - x[None, :, :]
    l2 = jnp.sum(diff * diff, axis=-1)
    n = x.shape[0]
    bw = jnp.sum(l2) / (n * n - n)
    mult = (MUL_FACTOR ** (jnp.arange(N_KERNELS) - N_KERNELS // 2)).astype(jnp.float32)
    return jnp.sum(jnp.exp(-l2[None, ...] / (bw * mult)[:, None, None]), axis=0)


if __name__ == "__main__":
    key = jax.random.PRNGKey(0)
    N, D = 8, 32  # small sample count / feature dim consistent with RBF.forward(X: (N, D))
    x = jax.random.normal(key, (N, D), dtype=jnp.float32)

    out = rbf_forward(x)
    out = jax.block_until_ready(out)

    ref = _rbf_reference(x)
    assert out.shape == (N, N)
    assert jnp.allclose(out, ref, atol=1e-4, rtol=1e-4), "mismatch vs reference"

    print("KERNEL_OK")
</pallas_src>

<mosaic_0001>
module attributes {stable_mosaic.version = 11 : i64} {
  func.func @_rbf_tile_kernel(%arg0: i32, %arg1: i32, %arg2: memref<1xf32, #tpu.memory_space<smem>>, %arg3: memref<256x32xf32, #tpu.memory_space<vmem>>, %arg4: memref<256x32xf32, #tpu.memory_space<vmem>>, %arg5: memref<256x1xf32, #tpu.memory_space<vmem>>, %arg6: memref<1x256xf32, #tpu.memory_space<vmem>>, %arg7: memref<256x256xf32, #tpu.memory_space<vmem>>) attributes {dimension_semantics = [#tpu.dimension_semantics<parallel>, #tpu.dimension_semantics<parallel>], iteration_bounds = array<i64: 1, 1>, scalar_prefetch = 0 : i64, scratch_operands = 0 : i64, tpu.core_type = #tpu.core_type<tc>, window_params = [{transform_indices = @transform_0, window_bounds = array<i64: 1>}, {transform_indices = @transform_1, window_bounds = array<i64: 256, 32>}, {transform_indices = @transform_2, window_bounds = array<i64: 256, 32>}, {transform_indices = @transform_3, window_bounds = array<i64: 256, 1>}, {transform_indices = @transform_4, window_bounds = array<i64: 1, 256>}, {transform_indices = @transform_5, window_bounds = array<i64: 256, 256>}]} {
    %c0 = arith.constant 0 : index
    %c0_0 = arith.constant 0 : index
    %0 = vector.load %arg3[%c0, %c0_0] : memref<256x32xf32, #tpu.memory_space<vmem>>, vector<256x32xf32>
    %c0_1 = arith.constant 0 : index
    %c0_2 = arith.constant 0 : index
    %1 = vector.load %arg4[%c0_1, %c0_2] : memref<256x32xf32, #tpu.memory_space<vmem>>, vector<256x32xf32>
    %cst = arith.constant dense<0.000000e+00> : vector<256x256xf32>
    %2 = tpu.matmul %0, %1, %cst {dimension_numbers = #tpu.dot_dimension_numbers<[1], [1], [0], [0], [0, 0, 1, 0], [], []>} : vector<256x32xf32>, vector<256x32xf32>, vector<256x256xf32> -> vector<256x256xf32>
    %c0_3 = arith.constant 0 : index
    %c0_4 = arith.constant 0 : index
    %3 = vector.load %arg5[%c0_3, %c0_4] : memref<256x1xf32, #tpu.memory_space<vmem>>, vector<256x1xf32>
    %c0_5 = arith.constant 0 : index
    %c0_6 = arith.constant 0 : index
    %4 = vector.load %arg6[%c0_5, %c0_6] : memref<1x256xf32, #tpu.memory_space<vmem>>, vector<1x256xf32>
    %5 = vector.broadcast %3 : vector<256x1xf32> to vector<256x256xf32>
    %6 = vector.broadcast %4 : vector<1x256xf32> to vector<256x256xf32>
    %7 = arith.addf %5, %6 : vector<256x256xf32>
    %cst_7 = arith.constant 2.000000e+00 : f32
    %8 = vector.broadcast %cst_7 : f32 to vector<256x256xf32>
    %9 = arith.mulf %8, %2 : vector<256x256xf32>
    %10 = arith.subf %7, %9 : vector<256x256xf32>
    %cst_8 = arith.constant 0.000000e+00 : f32
    %11 = vector.broadcast %cst_8 : f32 to vector<256x256xf32>
    %12 = arith.maximumf %10, %11 : vector<256x256xf32>
    %c0_9 = arith.constant 0 : index
    %13 = memref.load %arg2[%c0_9] : memref<1xf32, #tpu.memory_space<smem>>
    %14 = vector.broadcast %13 : f32 to vector<256x256xf32>
    %15 = arith.mulf %12, %14 : vector<256x256xf32>
    %16 = math.exp %15 : vector<256x256xf32>
    %17 = arith.mulf %16, %16 : vector<256x256xf32>
    %18 = arith.addf %16, %17 : vector<256x256xf32>
    %19 = arith.mulf %17, %17 : vector<256x256xf32>
    %20 = arith.addf %18, %19 : vector<256x256xf32>
    %21 = arith.mulf %19, %19 : vector<256x256xf32>
    %22 = arith.addf %20, %21 : vector<256x256xf32>
    %23 = arith.mulf %21, %21 : vector<256x256xf32>
    %24 = arith.addf %22, %23 : vector<256x256xf32>
    %c0_10 = arith.constant 0 : index
    %c0_11 = arith.constant 0 : index
    %25 = vector.load %arg7[%c0_10, %c0_11] : memref<256x256xf32, #tpu.memory_space<vmem>>, vector<256x256xf32>
    tpu.vector_store %arg7[%c0_10, %c0_11], %24 {strides = array<i32>} : memref<256x256xf32, #tpu.memory_space<vmem>>, vector<256x256xf32>,
    return
  }
  func.func @transform_0(%arg0: i32, %arg1: i32) -> i32 {
    %c0_i32 = arith.constant 0 : i32
    %c0_i32_0 = arith.constant 0 : i32
    return %c0_i32 : i32
  }
  func.func @transform_1(%arg0: i32, %arg1: i32) -> (i32, i32) {
    %c0_i32 = arith.constant 0 : i32
    %c0_i32_0 = arith.constant 0 : i32
    return %arg0, %c0_i32 : i32, i32
  }
  func.func @transform_2(%arg0: i32, %arg1: i32) -> (i32, i32) {
    %c0_i32 = arith.constant 0 : i32
    %c0_i32_0 = arith.constant 0 : i32
    return %arg1, %c0_i32 : i32, i32
  }
  func.func @transform_3(%arg0: i32, %arg1: i32) -> (i32, i32) {
    %c0_i32 = arith.constant 0 : i32
    %c0_i32_0 = arith.constant 0 : i32
    return %arg0, %c0_i32 : i32, i32
  }
  func.func @transform_4(%arg0: i32, %arg1: i32) -> (i32, i32) {
    %c0_i32 = arith.constant 0 : i32
    %c0_i32_0 = arith.constant 0 : i32
    return %c0_i32, %arg1 : i32, i32
  }
  func.func @transform_5(%arg0: i32, %arg1: i32) -> (i32, i32) {
    %c0_i32 = arith.constant 0 : i32
    return %arg0, %arg1 : i32, i32
  }
}

</mosaic_0001>

<llo_original>
// kernel: tpu_custom_call.1
$region0: #{tpu_custom_call.1}
  #allocation0 [shape = 'u32[]', space=smem, size = 0x4, offset = 0x4, fixed_abs, tag = 'smem constant byte address 0x4 - core index']
  #allocation1 [shape = 'u32[144,128]{1,0:T(1,128)}', space=vmem, size = 0x12000, scoped, tag = 'internal scratch']
  #allocation2 [shape = 'f32[1]{0:T(128)S(6)}', space=smem, size = 0x200, scoped, tag = 'scoped memory for tpu_custom_call.1']
  %s0 = inlined_call_operand.<no memory space> [shape: f32[1], index: 0, kind: input, shape index: {}]
  %s1 = inlined_call_operand.vmem [shape: f32[256,32], index: 1, kind: input, shape index: {}]
  %s2 = inlined_call_operand.vmem [shape: f32[256,32], index: 2, kind: input, shape index: {}]
  %s3 = inlined_call_operand.vmem [shape: f32[256,1], index: 3, kind: input, shape index: {}]
  %s4 = inlined_call_operand.vmem [shape: f32[1,256], index: 4, kind: input, shape index: {}]
  %s5 = inlined_call_operand.hbm [shape: f32[256,256], index: 5, kind: output, shape index: {}]
  %s6 = sld [smem:[#allocation0]]
  $region30: #{tpu_custom_call.1} parent=0
    _
  %s8 = ssub.s32 1, %s6
  %s9 = scalar_select 0, %s8, %s6
  %10 = sst [smem:[#allocation2]] %s0
  $region1: #{tpu_custom_call.1} parent=0
    #allocation3 [shape = 'u8[262144]{0}', space=vmem, size = 0x40000, scoped, tag = 'output window, operand 0, single buffered']
    #allocation4 [shape = 's32[1]{0}', space=sflag, size = 0x4, scoped, tag = 'scoped memory for tpu_custom_call.1']
    %11 = vsyncpa [#allocation4], 0
    // Predicated region
    $region2: #{tpu_custom_call.1} parent=1 // pred_check
      _
    $region3: #{tpu_custom_call.1} parent=1 // pred_check_branch
      %13 = sbr.rel (0) target = $region5
    $region4: #{tpu_custom_call.1} parent=1 // pred_region
      _
    $region5: #{tpu_custom_call.1} parent=1 // pred_fallthru
      _
    // Predicated region
    $region6: #{tpu_custom_call.1} parent=1 // pred_check
      _
    $region7: #{tpu_custom_call.1} parent=1 // pred_check_branch
      %15 = sbr.rel (0) target = $region9
    $region8: #{tpu_custom_call.1} parent=1 // pred_region
      _
    $region9: #{tpu_custom_call.1} parent=1 // pred_fallthru
      _
    // Predicated region
    $region10: #{tpu_custom_call.1} parent=1 // pred_check
      _
    $region11: #{tpu_custom_call.1} parent=1 // pred_check_branch
      %17 = sbr.rel (0) target = $region13
    $region12: #{tpu_custom_call.1} parent=1 // pred_region
      _
    $region13: #{tpu_custom_call.1} parent=1 // pred_fallthru
      _
    // Predicated region
    $region14: #{tpu_custom_call.1} parent=1 // pred_check
      _
    $region15: #{tpu_custom_call.1} parent=1 // pred_check_branch
      %19 = sbr.rel (0) target = $region17
    $region16: #{tpu_custom_call.1} parent=1 // pred_region
      _
    $region17: #{tpu_custom_call.1} parent=1 // pred_fallthru
      _
    // Predicated region
    $region18: #{tpu_custom_call.1} parent=1 // pred_check
      _
    $region19: #{tpu_custom_call.1} parent=1 // pred_check_branch
      %21 = sbr.rel (0) target = $region21
    $region20: #{tpu_custom_call.1} parent=1 // pred_region
      _
    $region21: #{tpu_custom_call.1} parent=1 // pred_fallthru
      _
    %v22 = vld [vmem:[%s1] sm:$0xff]
    %v23 = vld [vmem:[%s1 + $0x8] sm:$0xff]
    %v24 = vld [vmem:[%s1 + $0x10] sm:$0xff]
    %v25 = vld [vmem:[%s1 + $0x18] sm:$0xff]
    %v26 = vld [vmem:[%s1 + $0x20] sm:$0xff]
    %v27 = vld [vmem:[%s1 + $0x28] sm:$0xff]
    %v28 = vld [vmem:[%s1 + $0x30] sm:$0xff]
    %v29 = vld [vmem:[%s1 + $0x38] sm:$0xff]
    %v30 = vld [vmem:[%s1 + $0x40] sm:$0xff]
    %v31 = vld [vmem:[%s1 + $0x48] sm:$0xff]
    %v32 = vld [vmem:[%s1 + $0x50] sm:$0xff]
    %v33 = vld [vmem:[%s1 + $0x58] sm:$0xff]
    %v34 = vld [vmem:[%s1 + $0x60] sm:$0xff]
    %v35 = vld [vmem:[%s1 + $0x68] sm:$0xff]
    %v36 = vld [vmem:[%s1 + $0x70] sm:$0xff]
    %v37 = vld [vmem:[%s1 + $0x78] sm:$0xff]
    %v38 = vld [vmem:[%s1 + $0x80] sm:$0xff]
    %v39 = vld [vmem:[%s1 + $0x88] sm:$0xff]
    %v40 = vld [vmem:[%s1 + $0x90] sm:$0xff]
    %v41 = vld [vmem:[%s1 + $0x98] sm:$0xff]
    %v42 = vld [vmem:[%s1 + $0xa0] sm:$0xff]
    %v43 = vld [vmem:[%s1 + $0xa8] sm:$0xff]
    %v44 = vld [vmem:[%s1 + $0xb0] sm:$0xff]
    %v45 = vld [vmem:[%s1 + $0xb8] sm:$0xff]
    %v46 = vld [vmem:[%s1 + $0xc0] sm:$0xff]
    %v47 = vld [vmem:[%s1 + $0xc8] sm:$0xff]
    %v48 = vld [vmem:[%s1 + $0xd0] sm:$0xff]
    %v49 = vld [vmem:[%s1 + $0xd8] sm:$0xff]
    %v50 = vld [vmem:[%s1 + $0xe0] sm:$0xff]
    %v51 = vld [vmem:[%s1 + $0xe8] sm:$0xff]
    %v52 = vld [vmem:[%s1 + $0xf0] sm:$0xff]
    %v53 = vld [vmem:[%s1 + $0xf8] sm:$0xff]
    %v54 = vld [vmem:[%s2] sm:$0xff]
    %v55 = vld [vmem:[%s2 + $0x8] sm:$0xff]
    %v56 = vld [vmem:[%s2 + $0x10] sm:$0xff]
    %v57 = vld [vmem:[%s2 + $0x18] sm:$0xff]
    %v58 = vld [vmem:[%s2 + $0x20] sm:$0xff]
    %v59 = vld [vmem:[%s2 + $0x28] sm:$0xff]
    %v60 = vld [vmem:[%s2 + $0x30] sm:$0xff]
    %v61 = vld [vmem:[%s2 + $0x38] sm:$0xff]
    %v62 = vld [vmem:[%s2 + $0x40] sm:$0xff]
    %v63 = vld [vmem:[%s2 + $0x48] sm:$0xff]
    %v64 = vld [vmem:[%s2 + $0x50] sm:$0xff]
    %v65 = vld [vmem:[%s2 + $0x58] sm:$0xff]
    %v66 = vld [vmem:[%s2 + $0x60] sm:$0xff]
    %v67 = vld [vmem:[%s2 + $0x68] sm:$0xff]
    %v68 = vld [vmem:[%s2 + $0x70] sm:$0xff]
    %v69 = vld [vmem:[%s2 + $0x78] sm:$0xff]
    %v70 = vld [vmem:[%s2 + $0x80] sm:$0xff]
    %v71 = vld [vmem:[%s2 + $0x88] sm:$0xff]
    %v72 = vld [vmem:[%s2 + $0x90] sm:$0xff]
    %v73 = vld [vmem:[%s2 + $0x98] sm:$0xff]
    %v74 = vld [vmem:[%s2 + $0xa0] sm:$0xff]
    %v75 = vld [vmem:[%s2 + $0xa8] sm:$0xff]
    %v76 = vld [vmem:[%s2 + $0xb0] sm:$0xff]
    %v77 = vld [vmem:[%s2 + $0xb8] sm:$0xff]
    %v78 = vld [vmem:[%s2 + $0xc0] sm:$0xff]
    %v79 = vld [vmem:[%s2 + $0xc8] sm:$0xff]
    %v80 = vld [vmem:[%s2 + $0xd0] sm:$0xff]
    %v81 = vld [vmem:[%s2 + $0xd8] sm:$0xff]
    %v82 = vld [vmem:[%s2 + $0xe0] sm:$0xff]
    %v83 = vld [vmem:[%s2 + $0xe8] sm:$0xff]
    %v84 = vld [vmem:[%s2 + $0xf0] sm:$0xff]
    %v85 = vld [vmem:[%s2 + $0xf8] sm:$0xff]
    %vm86 = vcmask 261120
    %v88 = vsel %vm86, %v22, 0
    %v91 = vsel %vm86, %v23, 0
    %v94 = vsel %vm86, %v24, 0
    %v97 = vsel %vm86, %v25, 0
    %v100 = vsel %vm86, %v26, 0
    %v103 = vsel %vm86, %v27, 0
    %v106 = vsel %vm86, %v28, 0
    %v109 = vsel %vm86, %v29, 0
    %v112 = vsel %vm86, %v30, 0
    %v115 = vsel %vm86, %v31, 0
    %v118 = vsel %vm86, %v32, 0
    %v121 = vsel %vm86, %v33, 0
    %v124 = vsel %vm86, %v34, 0
    %v127 = vsel %vm86, %v35, 0
    %v130 = vsel %vm86, %v36, 0
    %v133 = vsel %vm86, %v37, 0
    %v136 = vsel %vm86, %v38, 0
    %v139 = vsel %vm86, %v39, 0
    %v142 = vsel %vm86, %v40, 0
    %v145 = vsel %vm86, %v41, 0
    %v148 = vsel %vm86, %v42, 0
    %v151 = vsel %vm86, %v43, 0
    %v154 = vsel %vm86, %v44, 0
    %v157 = vsel %vm86, %v45, 0
    %v160 = vsel %vm86, %v46, 0
    %v163 = vsel %vm86, %v47, 0
    %v166 = vsel %vm86, %v48, 0
    %v169 = vsel %vm86, %v49, 0
    %v172 = vsel %vm86, %v50, 0
    %v175 = vsel %vm86, %v51, 0
    %v178 = vsel %vm86, %v52, 0
    %v181 = vsel %vm86, %v53, 0
    %v184 = vsel %vm86, %v54, 0
    %v187 = vsel %vm86, %v55, 0
    %v190 = vsel %vm86, %v56, 0
    %v193 = vsel %vm86, %v57, 0
    %v196 = vsel %vm86, %v58, 0
    %v199 = vsel %vm86, %v59, 0
    %v202 = vsel %vm86, %v60, 0
    %v205 = vsel %vm86, %v61, 0
    %v208 = vsel %vm86, %v62, 0
    %v211 = vsel %vm86, %v63, 0
    %v214 = vsel %vm86, %v64, 0
    %v217 = vsel %vm86, %v65, 0
    %v220 = vsel %vm86, %v66, 0
    %v223 = vsel %vm86, %v67, 0
    %v226 = vsel %vm86, %v68, 0
    %v229 = vsel %vm86, %v69, 0
    %v232 = vsel %vm86, %v70, 0
    %v235 = vsel %vm86, %v71, 0
    %v238 = vsel %vm86, %v72, 0
    %v241 = vsel %vm86, %v73, 0
    %v244 = vsel %vm86, %v74, 0
    %v247 = vsel %vm86, %v75, 0
    %v250 = vsel %vm86, %v76, 0
    %v253 = vsel %vm86, %v77, 0
    %v256 = vsel %vm86, %v78, 0
    %v259 = vsel %vm86, %v79, 0
    %v262 = vsel %vm86, %v80, 0
    %v265 = vsel %vm86, %v81, 0
    %v268 = vsel %vm86, %v82, 0
    %v271 = vsel %vm86, %v83, 0
    %v274 = vsel %vm86, %v84, 0
    %v277 = vsel %vm86, %v85, 0
    %279 = vmatprep.subr.mxu0 0.0
    %280 = vmatpush1.xpose.msra.mxu0 %v184
    %281 = vmatprep.subr.mxu0 0.0
    %282 = vmatpush1.xpose.msra.mxu0 %v187
    %283 = vmatprep.subr.mxu0 0.0
    %284 = vmatpush1.xpose.msra.mxu0 %v190
    %285 = vmatprep.subr.mxu0 0.0
    %286 = vmatpush1.xpose.msra.mxu0 %v193
    %287 = vmatprep.subr.mxu0 0.0
    %288 = vmatpush1.xpose.msra.mxu0 %v196
    %289 = vmatprep.subr.mxu0 0.0
    %290 = vmatpush1.xpose.msra.mxu0 %v199
    %291 = vmatprep.subr.mxu0 0.0
    %292 = vmatpush1.xpose.msra.mxu0 %v202
    %293 = vmatprep.subr.mxu0 0.0
    %294 = vmatpush1.xpose.msra.mxu0 %v205
    %295 = vmatprep.subr.mxu0 0.0
    %296 = vmatpush1.xpose.msra.mxu0 %v208
    %297 = vmatprep.subr.mxu0 0.0
    %298 = vmatpush1.xpose.msra.mxu0 %v211
    %299 = vmatprep.subr.mxu0 0.0
    %300 = vmatpush1.xpose.msra.mxu0 %v214
    %301 = vmatprep.subr.mxu0 0.0
    %302 = vmatpush1.xpose.msra.mxu0 %v217
    %303 = vmatprep.subr.mxu0 0.0
    %304 = vmatpush1.xpose.msra.mxu0 %v220
    %305 = vmatprep.subr.mxu0 0.0
    %306 = vmatpush1.xpose.msra.mxu0 %v223
    %307 = vmatprep.subr.mxu0 0.0
    %308 = vmatpush1.xpose.msra.mxu0 %v226
    %309 = vmatprep.subr.mxu0 0.0
    %310 = vmatpush1.xpose.msra.mxu0 %v229
    %311 = vmatprep.subr.mxu0 0.0
    %312 = vmatpush1.xpose.msra.mxu0 %v232
    %313 = vmatprep.subr.mxu0 0.0
    %314 = vmatpush1.xpose.msra.mxu0 %v235
    %315 = vmatprep.subr.mxu0 0.0
    %316 = vmatpush1.xpose.msra.mxu0 %v238
    %317 = vmatprep.subr.mxu0 0.0
    %318 = vmatpush1.xpose.msra.mxu0 %v241
    %319 = vmatprep.subr.mxu0 0.0
    %320 = vmatpush1.xpose.msra.mxu0 %v244
    %321 = vmatprep.subr.mxu0 0.0
    %322 = vmatpush1.xpose.msra.mxu0 %v247
    %323 = vmatprep.subr.mxu0 0.0
    %324 = vmatpush1.xpose.msra.mxu0 %v250
    %325 = vmatprep.subr.mxu0 0.0
    %326 = vmatpush1.xpose.msra.mxu0 %v253
    %327 = vmatprep.subr.mxu0 0.0
    %328 = vmatpush1.xpose.msra.mxu0 %v256
    %329 = vmatprep.subr.mxu0 0.0
    %330 = vmatpush1.xpose.msra.mxu0 %v259
    %331 = vmatprep.subr.mxu0 0.0
    %332 = vmatpush1.xpose.msra.mxu0 %v262
    %333 = vmatprep.subr.mxu0 0.0
    %334 = vmatpush1.xpose.msra.mxu0 %v265
    %335 = vmatprep.subr.mxu0 0.0
    %336 = vmatpush1.xpose.msra.mxu0 %v268
    %337 = vmatprep.subr.mxu0 0.0
    %338 = vmatpush1.xpose.msra.mxu0 %v271
    %339 = vmatprep.subr.mxu0 0.0
    %340 = vmatpush1.xpose.msra.mxu0 %v274
    %341 = vmatprep.subr.mxu0 0.0
    %342 = vmatpush1.xpose.msra.mxu0 %v277
    %343 = vmatprep.mubr.f32.mxu0 0.0
    %344 = vmatmul.mubr.f32.gmra.mrb[0].mxu0 %v88
    %v345 = vpop.f32.mrb[0].mxu0
    %v346 = vadd.f32 0.0, %v345
    %v347 = vpop.f32.mrb[0].mxu0
    %v348 = vadd.f32 0.0, %v347
    %349 = vmatprep.mubr.f32.mxu0 0.0
    %350 = vmatmul.mubr.f32.gmra.mrb[0].mxu0 %v91
    %v351 = vpop.f32.mrb[0].mxu0
    %v352 = vadd.f32 0.0, %v351
    %v353 = vpop.f32.mrb[0].mxu0
    %v354 = vadd.f32 0.0, %v353
    %355 = vmatprep.mubr.f32.mxu0 0.0
    %356 = vmatmul.mubr.f32.gmra.mrb[0].mxu0 %v94
    %v357 = vpop.f32.mrb[0].mxu0
    %v358 = vadd.f32 0.0, %v357
    %v359 = vpop.f32.mrb[0].mxu0
    %v360 = vadd.f32 0.0, %v359
    %361 = vmatprep.mubr.f32.mxu0 0.0
    %362 = vmatmul.mubr.f32.gmra.mrb[0].mxu0 %v97
    %v363 = vpop.f32.mrb[0].mxu0
    %v364 = vadd.f32 0.0, %v363
    %v365 = vpop.f32.mrb[0].mxu0
    %v366 = vadd.f32 0.0, %v365
    %367 = vmatprep.mubr.f32.mxu0 0.0
    %368 = vmatmul.mubr.f32.gmra.mrb[0].mxu0 %v100
    %v369 = vpop.f32.mrb[0].mxu0
    %v370 = vadd.f32 0.0, %v369
    %v371 = vpop.f32.mrb[0].mxu0
    %v372 = vadd.f32 0.0, %v371
    %373 = vmatprep.mubr.f32.mxu0 0.0
    %374 = vmatmul.mubr.f32.gmra.mrb[0].mxu0 %v103
    %v375 = vpop.f32.mrb[0].mxu0
    %v376 = vadd.f32 0.0, %v375
    %v377 = vpop.f32.mrb[0].mxu0
    %v378 = vadd.f32 0.0, %v377
    %379 = vmatprep.mubr.f32.mxu0 0.0
    %380 = vmatmul.mubr.f32.gmra.mrb[0].mxu0 %v106
    %v381 = vpop.f32.mrb[0].mxu0
    %v382 = vadd.f32 0.0, %v381
    %v383 = vpop.f32.mrb[0].mxu0
    %v384 = vadd.f32 0.0, %v383
    %385 = vmatprep.mubr.f32.mxu0 0.0
    %386 = vmatmul.mubr.f32.gmra.mrb[0].mxu0 %v109
    %v387 = vpop.f32.mrb[0].mxu0
    %v388 = vadd.f32 0.0, %v387
    %v389 = vpop.f32.mrb[0].mxu0
    %v390 = vadd.f32 0.0, %v389
    %391 = vmatprep.mubr.f32.mxu0 0.0
    %392 = vmatmul.mubr.f32.gmra.mrb[0].mxu0 %v112
    %v393 = vpop.f32.mrb[0].mxu0
    %v394 = vadd.f32 0.0, %v393
    %v395 = vpop.f32.mrb[0].mxu0
    %v396 = vadd.f32 0.0, %v395
    %397 = vmatprep.mubr.f32.mxu0 0.0
    %398 = vmatmul.mubr.f32.gmra.mrb[0].mxu0 %v115
    %v399 = vpop.f32.mrb[0].mxu0
    %v400 = vadd.f32 0.0, %v399
    %v401 = vpop.f32.mrb[0].mxu0
    %v402 = vadd.f32 0.0, %v401
    %403 = vmatprep.mubr.f32.mxu0 0.0
    %404 = vmatmul.mubr.f32.gmra.mrb[0].mxu0 %v118
    %v405 = vpop.f32.mrb[0].mxu0
    %v406 = vadd.f32 0.0, %v405
    %v407 = vpop.f32.mrb[0].mxu0
    %v408 = vadd.f32 0.0, %v407
    %409 = vmatprep.mubr.f32.mxu0 0.0
    %410 = vmatmul.mubr.f32.gmra.mrb[0].mxu0 %v121
    %v411 = vpop.f32.mrb[0].mxu0
    %v412 = vadd.f32 0.0, %v411
    %v413 = vpop.f32.mrb[0].mxu0
    %v414 = vadd.f32 0.0, %v413
    %415 = vmatprep.mubr.f32.mxu0 0.0
    %416 = vmatmul.mubr.f32.gmra.mrb[0].mxu0 %v124
    %v417 = vpop.f32.mrb[0].mxu0
    %v418 = vadd.f32 0.0, %v417
    %v419 = vpop.f32.mrb[0].mxu0
    %v420 = vadd.f32 0.0, %v419
    %421 = vmatprep.mubr.f32.mxu0 0.0
    %422 = vmatmul.mubr.f32.gmra.mrb[0].mxu0 %v127
    %v423 = vpop.f32.mrb[0].mxu0
    %v424 = vadd.f32 0.0, %v423
    %v425 = vpop.f32.mrb[0].mxu0
    %v426 = vadd.f32 0.0, %v425
    %427 = vmatprep.mubr.f32.mxu0 0.0
    %428 = vmatmul.mubr.f32.gmra.mrb[0].mxu0 %v130
    %v429 = vpop.f32.mrb[0].mxu0
    %v430 = vadd.f32 0.0, %v429
    %v431 = vpop.f32.mrb[0].mxu0
    %v432 = vadd.f32 0.0, %v431
    %433 = vmatprep.mubr.f32.mxu0 0.0
    %434 = vmatmul.mubr.f32.gmra.mrb[0].mxu0 %v133
    %v435 = vpop.f32.mrb[0].mxu0
    %v436 = vadd.f32 0.0, %v435
    %v437 = vpop.f32.mrb[0].mxu0
    %v438 = vadd.f32 0.0, %v437
    %439 = vmatprep.mubr.f32.mxu0 0.0
    %440 = vmatmul.mubr.f32.gmra.mrb[0].mxu0 %v136
    %v441 = vpop.f32.mrb[0].mxu0
    %v442 = vadd.f32 0.0, %v441
    %v443 = vpop.f32.mrb[0].mxu0
    %v444 = vadd.f32 0.0, %v443
    %445 = vmatprep.mubr.f32.mxu0 0.0
    %446 = vmatmul.mubr.f32.gmra.mrb[0].mxu0 %v139
    %v447 = vpop.f32.mrb[0].mxu0
    %v448 = vadd.f32 0.0, %v447
    %v449 = vpop.f32.mrb[0].mxu0
    %v450 = vadd.f32 0.0, %v449
    %451 = vmatprep.mubr.f32.mxu0 0.0
    %452 = vmatmul.mubr.f32.gmra.mrb[0].mxu0 %v142
    %v453 = vpop.f32.mrb[0].mxu0
    %v454 = vadd.f32 0.0, %v453
    %v455 = vpop.f32.mrb[0].mxu0
    %v456 = vadd.f32 0.0, %v455
    %457 = vmatprep.mubr.f32.mxu0 0.0
    %458 = vmatmul.mubr.f32.gmra.mrb[0].mxu0 %v145
    %v459 = vpop.f32.mrb[0].mxu0
    %v460 = vadd.f32 0.0, %v459
    %v461 = vpop.f32.mrb[0].mxu0
    %v462 = vadd.f32 0.0, %v461
    %463 = vmatprep.mubr.f32.mxu0 0.0
    %464 = vmatmul.mubr.f32.gmra.mrb[0].mxu0 %v148
    %v465 = vpop.f32.mrb[0].mxu0
    %v466 = vadd.f32 0.0, %v465
    %v467 = vpop.f32.mrb[0].mxu0
    %v468 = vadd.f32 0.0, %v467
    %469 = vmatprep.mubr.f32.mxu0 0.0
    %470 = vmatmul.mubr.f32.gmra.mrb[0].mxu0 %v151
    %v471 = vpop.f32.mrb[0].mxu0
    %v472 = vadd.f32 0.0, %v471
    %v473 = vpop.f32.mrb[0].mxu0
    %v474 = vadd.f32 0.0, %v473
    %475 = vmatprep.mubr.f32.mxu0 0.0
    %476 = vmatmul.mubr.f32.gmra.mrb[0].mxu0 %v154
    %v477 = vpop.f32.mrb[0].mxu0
    %v478 = vadd.f32 0.0, %v477
    %v479 = vpop.f32.mrb[0].mxu0
    %v480 = vadd.f32 0.0, %v479
    %481 = vmatprep.mubr.f32.mxu0 0.0
    %482 = vmatmul.mubr.f32.gmra.mrb[0].mxu0 %v157
    %v483 = vpop.f32.mrb[0].mxu0
    %v484 = vadd.f32 0.0, %v483
    %v485 = vpop.f32.mrb[0].mxu0
    %v486 = vadd.f32 0.0, %v485
    %487 = vmatprep.mubr.f32.mxu0 0.0
    %488 = vmatmul.mubr.f32.gmra.mrb[0].mxu0 %v160
    %v489 = vpop.f32.mrb[0].mxu0
    %v490 = vadd.f32 0.0, %v489
    %v491 = vpop.f32.mrb[0].mxu0
    %v492 = vadd.f32 0.0, %v491
    %493 = vmatprep.mubr.f32.mxu0 0.0
    %494 = vmatmul.mubr.f32.gmra.mrb[0].mxu0 %v163
    %v495 = vpop.f32.mrb[0].mxu0
    %v496 = vadd.f32 0.0, %v495
    %v497 = vpop.f32.mrb[0].mxu0
    %v498 = vadd.f32 0.0, %v497
    %499 = vmatprep.mubr.f32.mxu0 0.0
    %500 = vmatmul.mubr.f32.gmra.mrb[0].mxu0 %v166
    %v501 = vpop.f32.mrb[0].mxu0
    %v502 = vadd.f32 0.0, %v501
    %v503 = vpop.f32.mrb[0].mxu0
    %v504 = vadd.f32 0.0, %v503
    %505 = vmatprep.mubr.f32.mxu0 0.0
    %506 = vmatmul.mubr.f32.gmra.mrb[0].mxu0 %v169
    %v507 = vpop.f32.mrb[0].mxu0
    %v508 = vadd.f32 0.0, %v507
    %v509 = vpop.f32.mrb[0].mxu0
    %v510 = vadd.f32 0.0, %v509
    %511 = vmatprep.mubr.f32.mxu0 0.0
    %512 = vmatmul.mubr.f32.gmra.mrb[0].mxu0 %v172
    %v513 = vpop.f32.mrb[0].mxu0
    %v514 = vadd.f32 0.0, %v513
    %v515 = vpop.f32.mrb[0].mxu0
    %v516 = vadd.f32 0.0, %v515
    %517 = vmatprep.mubr.f32.mxu0 0.0
    %518 = vmatmul.mubr.f32.gmra.mrb[0].mxu0 %v175
    %v519 = vpop.f32.mrb[0].mxu0
    %v520 = vadd.f32 0.0, %v519
    %v521 = vpop.f32.mrb[0].mxu0
    %v522 = vadd.f32 0.0, %v521
    %523 = vmatprep.mubr.f32.mxu0 0.0
    %524 = vmatmul.mubr.f32.gmra.mrb[0].mxu0 %v178
    %v525 = vpop.f32.mrb[0].mxu0
    %v526 = vadd.f32 0.0, %v525
    %v527 = vpop.f32.mrb[0].mxu0
    %v528 = vadd.f32 0.0, %v527
    %529 = vmatprep.mubr.f32.mxu0 0.0
    %530 = vmatmul.mubr.f32.gmra.mrb[0].mxu0 %v181
    %v531 = vpop.f32.mrb[0].mxu0
    %v532 = vadd.f32 0.0, %v531
    %v533 = vpop.f32.mrb[0].mxu0
    %v534 = vadd.f32 0.0, %v533
    %535 = vdwg.mxu0
    %v536 = vld [vmem:[%s3] sm:$0xff]
    %v537 = vld [vmem:[%s3 + $0x8] sm:$0xff]
    %v538 = vld [vmem:[%s3 + $0x10] sm:$0xff]
    %v539 = vld [vmem:[%s3 + $0x18] sm:$0xff]
    %v540 = vld [vmem:[%s3 + $0x20] sm:$0xff]
    %v541 = vld [vmem:[%s3 + $0x28] sm:$0xff]
    %v542 = vld [vmem:[%s3 + $0x30] sm:$0xff]
    %v543 = vld [vmem:[%s3 + $0x38] sm:$0xff]
    %v544 = vld [vmem:[%s3 + $0x40] sm:$0xff]
    %v545 = vld [vmem:[%s3 + $0x48] sm:$0xff]
    %v546 = vld [vmem:[%s3 + $0x50] sm:$0xff]
    %v547 = vld [vmem:[%s3 + $0x58] sm:$0xff]
    %v548 = vld [vmem:[%s3 + $0x60] sm:$0xff]
    %v549 = vld [vmem:[%s3 + $0x68] sm:$0xff]
    %v550 = vld [vmem:[%s3 + $0x70] sm:$0xff]
    %v551 = vld [vmem:[%s3 + $0x78] sm:$0xff]
    %v552 = vld [vmem:[%s3 + $0x80] sm:$0xff]
    %v553 = vld [vmem:[%s3 + $0x88] sm:$0xff]
    %v554 = vld [vmem:[%s3 + $0x90] sm:$0xff]
    %v555 = vld [vmem:[%s3 + $0x98] sm:$0xff]
    %v556 = vld [vmem:[%s3 + $0xa0] sm:$0xff]
    %v557 = vld [vmem:[%s3 + $0xa8] sm:$0xff]
    %v558 = vld [vmem:[%s3 + $0xb0] sm:$0xff]
    %v559 = vld [vmem:[%s3 + $0xb8] sm:$0xff]
    %v560 = vld [vmem:[%s3 + $0xc0] sm:$0xff]
    %v561 = vld [vmem:[%s3 + $0xc8] sm:$0xff]
    %v562 = vld [vmem:[%s3 + $0xd0] sm:$0xff]
    %v563 = vld [vmem:[%s3 + $0xd8] sm:$0xff]
    %v564 = vld [vmem:[%s3 + $0xe0] sm:$0xff]
    %v565 = vld [vmem:[%s3 + $0xe8] sm:$0xff]
    %v566 = vld [vmem:[%s3 + $0xf0] sm:$0xff]
    %v567 = vld [vmem:[%s3 + $0xf8] sm:$0xff]
    %v568 = vld [vmem:[%s4] sm:$0x3]
    %570 = vset.pattern.permute.xlu0 0
    %571 = vperm.xlu0 %570, %v536
    %v572 = vpop.permute.xlu0 %571
    %575 = vset.pattern.permute.xlu0 0
    %576 = vperm.xlu0 %575, %v537
    %v577 = vpop.permute.xlu0 %576
    %580 = vset.pattern.permute.xlu0 0
    %581 = vperm.xlu0 %580, %v538
    %v582 = vpop.permute.xlu0 %581
    %585 = vset.pattern.permute.xlu0 0
    %586 = vperm.xlu0 %585, %v539
    %v587 = vpop.permute.xlu0 %586
    %590 = vset.pattern.permute.xlu0 0
    %591 = vperm.xlu0 %590, %v540
    %v592 = vpop.permute.xlu0 %591
    %595 = vset.pattern.permute.xlu0 0
    %596 = vperm.xlu0 %595, %v541
    %v597 = vpop.permute.xlu0 %596
    %600 = vset.pattern.permute.xlu0 0
    %601 = vperm.xlu0 %600, %v542
    %v602 = vpop.permute.xlu0 %601
    %605 = vset.pattern.permute.xlu0 0
    %606 = vperm.xlu0 %605, %v543
    %v607 = vpop.permute.xlu0 %606
    %610 = vset.pattern.permute.xlu0 0
    %611 = vperm.xlu0 %610, %v544
    %v612 = vpop.permute.xlu0 %611
    %615 = vset.pattern.permute.xlu0 0
    %616 = vperm.xlu0 %615, %v545
    %v617 = vpop.permute.xlu0 %616
    %620 = vset.pattern.permute.xlu0 0
    %621 = vperm.xlu0 %620, %v546
    %v622 = vpop.permute.xlu0 %621
    %625 = vset.pattern.permute.xlu0 0
    %626 = vperm.xlu0 %625, %v547
    %v627 = vpop.permute.xlu0 %626
    %630 = vset.pattern.permute.xlu0 0
    %631 = vperm.xlu0 %630, %v548
    %v632 = vpop.permute.xlu0 %631
    %635 = vset.pattern.permute.xlu0 0
    %636 = vperm.xlu0 %635, %v549
    %v637 = vpop.permute.xlu0 %636
    %640 = vset.pattern.permute.xlu0 0
    %641 = vperm.xlu0 %640, %v550
    %v642 = vpop.permute.xlu0 %641
    %645 = vset.pattern.permute.xlu0 0
    %646 = vperm.xlu0 %645, %v551
    %v647 = vpop.permute.xlu0 %646
    %650 = vset.pattern.permute.xlu0 0
    %651 = vperm.xlu0 %650, %v552
    %v652 = vpop.permute.xlu0 %651
    %655 = vset.pattern.permute.xlu0 0
    %656 = vperm.xlu0 %655, %v553
    %v657 = vpop.permute.xlu0 %656
    %660 = vset.pattern.permute.xlu0 0
    %661 = vperm.xlu0 %660, %v554
    %v662 = vpop.permute.xlu0 %661
    %665 = vset.pattern.permute.xlu0 0
    %666 = vperm.xlu0 %665, %v555
    %v667 = vpop.permute.xlu0 %666
    %670 = vset.pattern.permute.xlu0 0
    %671 = vperm.xlu0 %670, %v556
    %v672 = vpop.permute.xlu0 %671
    %675 = vset.pattern.permute.xlu0 0
    %676 = vperm.xlu0 %675, %v557
    %v677 = vpop.permute.xlu0 %676
    %680 = vset.pattern.permute.xlu0 0
    %681 = vperm.xlu0 %680, %v558
    %v682 = vpop.permute.xlu0 %681
    %685 = vset.pattern.permute.xlu0 0
    %686 = vperm.xlu0 %685, %v559
    %v687 = vpop.permute.xlu0 %686
    %690 = vset.pattern.permute.xlu0 0
    %691 = vperm.xlu0 %690, %v560
    %v692 = vpop.permute.xlu0 %691
    %695 = vset.pattern.permute.xlu0 0
    %696 = vperm.xlu0 %695, %v561
    %v697 = vpop.permute.xlu0 %696
    %700 = vset.pattern.permute.xlu0 0
    %701 = vperm.xlu0 %700, %v562
    %v702 = vpop.permute.xlu0 %701
    %705 = vset.pattern.permute.xlu0 0
    %706 = vperm.xlu0 %705, %v563
    %v707 = vpop.permute.xlu0 %706
    %710 = vset.pattern.permute.xlu0 0
    %711 = vperm.xlu0 %710, %v564
    %v712 = vpop.permute.xlu0 %711
    %715 = vset.pattern.permute.xlu0 0
    %716 = vperm.xlu0 %715, %v565
    %v717 = vpop.permute.xlu0 %716
    %720 = vset.pattern.permute.xlu0 0
    %721 = vperm.xlu0 %720, %v566
    %v722 = vpop.permute.xlu0 %721
    %725 = vset.pattern.permute.xlu0 0
    %726 = vperm.xlu0 %725, %v567
    %v727 = vpop.permute.xlu0 %726
    %v730 = vlaneseq
    %v731 = vshrl.u32 %v730, 7
    %v732 = vsub.s32 0, %v731
    %v733 = vrot.slane %v568, %v732
    %v734 = vlaneseq
    %v735 = vshrl.u32 %v734, 7
    %v736 = vsub.s32 1, %v735
    %v737 = vrot.slane %v568, %v736
    %v740 = vadd.f32 %v572, %v733
    %v741 = vadd.f32 %v572, %v737
    %v742 = vadd.f32 %v577, %v733
    %v743 = vadd.f32 %v577, %v737
    %v744 = vadd.f32 %v582, %v733
    %v745 = vadd.f32 %v582, %v737
    %v746 = vadd.f32 %v587, %v733
    %v747 = vadd.f32 %v587, %v737
    %v748 = vadd.f32 %v592, %v733
    %v749 = vadd.f32 %v592, %v737
    %v750 = vadd.f32 %v597, %v733
    %v751 = vadd.f32 %v597, %v737
    %v752 = vadd.f32 %v602, %v733
    %v753 = vadd.f32 %v602, %v737
    %v754 = vadd.f32 %v607, %v733
    %v755 = vadd.f32 %v607, %v737
    %v756 = vadd.f32 %v612, %v733
    %v757 = vadd.f32 %v612, %v737
    %v758 = vadd.f32 %v617, %v733
    %v759 = vadd.f32 %v617, %v737
    %v760 = vadd.f32 %v622, %v733
    %v761 = vadd.f32 %v622, %v737
    %v762 = vadd.f32 %v627, %v733
    %v763 = vadd.f32 %v627, %v737
    %v764 = vadd.f32 %v632, %v733
    %v765 = vadd.f32 %v632, %v737
    %v766 = vadd.f32 %v637, %v733
    %v767 = vadd.f32 %v637, %v737
    %v768 = vadd.f32 %v642, %v733
    %v769 = vadd.f32 %v642, %v737
    %v770 = vadd.f32 %v647, %v733
    %v771 = vadd.f32 %v647, %v737
    %v772 = vadd.f32 %v652, %v733
    %v773 = vadd.f32 %v652, %v737
    %v774 = vadd.f32 %v657, %v733
    %v775 = vadd.f32 %v657, %v737
    %v776 = vadd.f32 %v662, %v733
    %v777 = vadd.f32 %v662, %v737
    %v778 = vadd.f32 %v667, %v733
    %v779 = vadd.f32 %v667, %v737
    %v780 = vadd.f32 %v672, %v733
    %v781 = vadd.f32 %v672, %v737
    %v782 = vadd.f32 %v677, %v733
    %v783 = vadd.f32 %v677, %v737
    %v784 = vadd.f32 %v682, %v733
    %v785 = vadd.f32 %v682, %v737
    %v786 = vadd.f32 %v687, %v733
    %v787 = vadd.f32 %v687, %v737
    %v788 = vadd.f32 %v692, %v733
    %v789 = vadd.f32 %v692, %v737
    %v790 = vadd.f32 %v697, %v733
    %v791 = vadd.f32 %v697, %v737
    %v792 = vadd.f32 %v702, %v733
    %v793 = vadd.f32 %v702, %v737
    %v794 = vadd.f32 %v707, %v733
    %v795 = vadd.f32 %v707, %v737
    %v796 = vadd.f32 %v712, %v733
    %v797 = vadd.f32 %v712, %v737
    %v798 = vadd.f32 %v717, %v733
    %v799 = vadd.f32 %v717, %v737
    %v800 = vadd.f32 %v722, %v733
    %v801 = vadd.f32 %v722, %v737
    %v802 = vadd.f32 %v727, %v733
    %v803 = vadd.f32 %v727, %v737
    %v804 = vmul.f32 %v346, 2.0
    %v805 = vmul.f32 %v348, 2.0
    %v806 = vmul.f32 %v352, 2.0
    %v807 = vmul.f32 %v354, 2.0
    %v808 = vmul.f32 %v358, 2.0
    %v809 = vmul.f32 %v360, 2.0
    %v810 = vmul.f32 %v364, 2.0
    %v811 = vmul.f32 %v366, 2.0
    %v812 = vmul.f32 %v370, 2.0
    %v813 = vmul.f32 %v372, 2.0
    %v814 = vmul.f32 %v376, 2.0
    %v815 = vmul.f32 %v378, 2.0
    %v816 = vmul.f32 %v382, 2.0
    %v817 = vmul.f32 %v384, 2.0
    %v818 = vmul.f32 %v388, 2.0
    %v819 = vmul.f32 %v390, 2.0
    %v820 = vmul.f32 %v394, 2.0
    %v821 = vmul.f32 %v396, 2.0
    %v822 = vmul.f32 %v400, 2.0
    %v823 = vmul.f32 %v402, 2.0
    %v824 = vmul.f32 %v406, 2.0
    %v825 = vmul.f32 %v408, 2.0
    %v826 = vmul.f32 %v412, 2.0
    %v827 = vmul.f32 %v414, 2.0
    %v828 = vmul.f32 %v418, 2.0
    %v829 = vmul.f32 %v420, 2.0
    %v830 = vmul.f32 %v424, 2.0
    %v831 = vmul.f32 %v426, 2.0
    %v832 = vmul.f32 %v430, 2.0
    %v833 = vmul.f32 %v432, 2.0
    %v834 = vmul.f32 %v436, 2.0
    %v835 = vmul.f32 %v438, 2.0
    %v836 = vmul.f32 %v442, 2.0
    %v837 = vmul.f32 %v444, 2.0
    %v838 = vmul.f32 %v448, 2.0
    %v839 = vmul.f32 %v450, 2.0
    %v840 = vmul.f32 %v454, 2.0
    %v841 = vmul.f32 %v456, 2.0
    %v842 = vmul.f32 %v460, 2.0
    %v843 = vmul.f32 %v462, 2.0
    %v844 = vmul.f32 %v466, 2.0
    %v845 = vmul.f32 %v468, 2.0
    %v846 = vmul.f32 %v472, 2.0
    %v847 = vmul.f32 %v474, 2.0
    %v848 = vmul.f32 %v478, 2.0
    %v849 = vmul.f32 %v480, 2.0
    %v850 = vmul.f32 %v484, 2.0
    %v851 = vmul.f32 %v486, 2.0
    %v852 = vmul.f32 %v490, 2.0
    %v853 = vmul.f32 %v492, 2.0
    %v854 = vmul.f32 %v496, 2.0
    %v855 = vmul.f32 %v498, 2.0
    %v856 = vmul.f32 %v502, 2.0
    %v857 = vmul.f32 %v504, 2.0
    %v858 = vmul.f32 %v508, 2.0
    %v859 = vmul.f32 %v510, 2.0
    %v860 = vmul.f32 %v514, 2.0
    %v861 = vmul.f32 %v516, 2.0
    %v862 = vmul.f32 %v520, 2.0
    %v863 = vmul.f32 %v522, 2.0
    %v864 = vmul.f32 %v526, 2.0
    %v865 = vmul.f32 %v528, 2.0
    %v866 = vmul.f32 %v532, 2.0
    %v867 = vmul.f32 %v534, 2.0
    %v868 = vsub.f32 %v740, %v804
    %v869 = vsub.f32 %v741, %v805
    %v870 = vsub.f32 %v742, %v806
    %v871 = vsub.f32 %v743, %v807
    %v872 = vsub.f32 %v744, %v808
    %v873 = vsub.f32 %v745, %v809
    %v874 = vsub.f32 %v746, %v810
    %v875 = vsub.f32 %v747, %v811
    %v876 = vsub.f32 %v748, %v812
    %v877 = vsub.f32 %v749, %v813
    %v878 = vsub.f32 %v750, %v814
    %v879 = vsub.f32 %v751, %v815
    %v880 = vsub.f32 %v752, %v816
    %v881 = vsub.f32 %v753, %v817
    %v882 = vsub.f32 %v754, %v818
    %v883 = vsub.f32 %v755, %v819
    %v884 = vsub.f32 %v756, %v820
    %v885 = vsub.f32 %v757, %v821
    %v886 = vsub.f32 %v758, %v822
    %v887 = vsub.f32 %v759, %v823
    %v888 = vsub.f32 %v760, %v824
    %v889 = vsub.f32 %v761, %v825
    %v890 = vsub.f32 %v762, %v826
    %v891 = vsub.f32 %v763, %v827
    %v892 = vsub.f32 %v764, %v828
    %v893 = vsub.f32 %v765, %v829
    %v894 = vsub.f32 %v766, %v830
    %v895 = vsub.f32 %v767, %v831
    %v896 = vsub.f32 %v768, %v832
    %v897 = vsub.f32 %v769, %v833
    %v898 = vsub.f32 %v770, %v834
    %v899 = vsub.f32 %v771, %v835
    %v900 = vsub.f32 %v772, %v836
    %v901 = vsub.f32 %v773, %v837
    %v902 = vsub.f32 %v774, %v838
    %v903 = vsub.f32 %v775, %v839
    %v904 = vsub.f32 %v776, %v840
    %v905 = vsub.f32 %v777, %v841
    %v906 = vsub.f32 %v778, %v842
    %v907 = vsub.f32 %v779, %v843
    %v908 = vsub.f32 %v780, %v844
    %v909 = vsub.f32 %v781, %v845
    %v910 = vsub.f32 %v782, %v846
    %v911 = vsub.f32 %v783, %v847
    %v912 = vsub.f32 %v784, %v848
    %v913 = vsub.f32 %v785, %v849
    %v914 = vsub.f32 %v786, %v850
    %v915 = vsub.f32 %v787, %v851
    %v916 = vsub.f32 %v788, %v852
    %v917 = vsub.f32 %v789, %v853
    %v918 = vsub.f32 %v790, %v854
    %v919 = vsub.f32 %v791, %v855
    %v920 = vsub.f32 %v792, %v856
    %v921 = vsub.f32 %v793, %v857
    %v922 = vsub.f32 %v794, %v858
    %v923 = vsub.f32 %v795, %v859
    %v924 = vsub.f32 %v796, %v860
    %v925 = vsub.f32 %v797, %v861
    %v926 = vsub.f32 %v798, %v862
    %v927 = vsub.f32 %v799, %v863
    %v928 = vsub.f32 %v800, %v864
    %v929 = vsub.f32 %v801, %v865
    %v930 = vsub.f32 %v802, %v866
    %v931 = vsub.f32 %v803, %v867
    %v932 = vmax.f32 %v868, 0.0
    %v933 = vmax.f32 %v869, 0.0
    %v934 = vmax.f32 %v870, 0.0
    %v935 = vmax.f32 %v871, 0.0
    %v936 = vmax.f32 %v872, 0.0
    %v937 = vmax.f32 %v873, 0.0
    %v938 = vmax.f32 %v874, 0.0
    %v939 = vmax.f32 %v875, 0.0
    %v940 = vmax.f32 %v876, 0.0
    %v941 = vmax.f32 %v877, 0.0
    %v942 = vmax.f32 %v878, 0.0
    %v943 = vmax.f32 %v879, 0.0
    %v944 = vmax.f32 %v880, 0.0
    %v945 = vmax.f32 %v881, 0.0
    %v946 = vmax.f32 %v882, 0.0
    %v947 = vmax.f32 %v883, 0.0
    %v948 = vmax.f32 %v884, 0.0
    %v949 = vmax.f32 %v885, 0.0
    %v950 = vmax.f32 %v886, 0.0
    %v951 = vmax.f32 %v887, 0.0
    %v952 = vmax.f32 %v888, 0.0
    %v953 = vmax.f32 %v889, 0.0
    %v954 = vmax.f32 %v890, 0.0
    %v955 = vmax.f32 %v891, 0.0
    %v956 = vmax.f32 %v892, 0.0
    %v957 = vmax.f32 %v893, 0.0
    %v958 = vmax.f32 %v894, 0.0
    %v959 = vmax.f32 %v895, 0.0
    %v960 = vmax.f32 %v896, 0.0
    %v961 = vmax.f32 %v897, 0.0
    %v962 = vmax.f32 %v898, 0.0
    %v963 = vmax.f32 %v899, 0.0
    %v964 = vmax.f32 %v900, 0.0
    %v965 = vmax.f32 %v901, 0.0
    %v966 = vmax.f32 %v902, 0.0
    %v967 = vmax.f32 %v903, 0.0
    %v968 = vmax.f32 %v904, 0.0
    %v969 = vmax.f32 %v905, 0.0
    %v970 = vmax.f32 %v906, 0.0
    %v971 = vmax.f32 %v907, 0.0
    %v972 = vmax.f32 %v908, 0.0
    %v973 = vmax.f32 %v909, 0.0
    %v974 = vmax.f32 %v910, 0.0
    %v975 = vmax.f32 %v911, 0.0
    %v976 = vmax.f32 %v912, 0.0
    %v977 = vmax.f32 %v913, 0.0
    %v978 = vmax.f32 %v914, 0.0
    %v979 = vmax.f32 %v915, 0.0
    %v980 = vmax.f32 %v916, 0.0
    %v981 = vmax.f32 %v917, 0.0
    %v982 = vmax.f32 %v918, 0.0
    %v983 = vmax.f32 %v919, 0.0
    %v984 = vmax.f32 %v920, 0.0
    %v985 = vmax.f32 %v921, 0.0
    %v986 = vmax.f32 %v922, 0.0
    %v987 = vmax.f32 %v923, 0.0
    %v988 = vmax.f32 %v924, 0.0
    %v989 = vmax.f32 %v925, 0.0
    %v990 = vmax.f32 %v926, 0.0
    %v991 = vmax.f32 %v927, 0.0
    %v992 = vmax.f32 %v928, 0.0
    %v993 = vmax.f32 %v929, 0.0
    %v994 = vmax.f32 %v930, 0.0
    %v995 = vmax.f32 %v931, 0.0
    %s996 = sld [smem:[#allocation2]]
    %v997 = vstv %s996
    %v998 = vmul.f32 %v932, %v997
    %v999 = vmul.f32 %v933, %v997
    %v1000 = vmul.f32 %v934, %v997
    %v1001 = vmul.f32 %v935, %v997
    %v1002 = vmul.f32 %v936, %v997
    %v1003 = vmul.f32 %v937, %v997
    %v1004 = vmul.f32 %v938, %v997
    %v1005 = vmul.f32 %v939, %v997
    %v1006 = vmul.f32 %v940, %v997
    %v1007 = vmul.f32 %v941, %v997
    %v1008 = vmul.f32 %v942, %v997
    %v1009 = vmul.f32 %v943, %v997
    %v1010 = vmul.f32 %v944, %v997
    %v1011 = vmul.f32 %v945, %v997
    %v1012 = vmul.f32 %v946, %v997
    %v1013 = vmul.f32 %v947, %v997
    %v1014 = vmul.f32 %v948, %v997
    %v1015 = vmul.f32 %v949, %v997
    %v1016 = vmul.f32 %v950, %v997
    %v1017 = vmul.f32 %v951, %v997
    %v1018 = vmul.f32 %v952, %v997
    %v1019 = vmul.f32 %v953, %v997
    %v1020 = vmul.f32 %v954, %v997
    %v1021 = vmul.f32 %v955, %v997
    %v1022 = vmul.f32 %v956, %v997
    %v1023 = vmul.f32 %v957, %v997
    %v1024 = vmul.f32 %v958, %v997
    %v1025 = vmul.f32 %v959, %v997
    %v1026 = vmul.f32 %v960, %v997
    %v1027 = vmul.f32 %v961, %v997
    %v1028 = vmul.f32 %v962, %v997
    %v1029 = vmul.f32 %v963, %v997
    %v1030 = vmul.f32 %v964, %v997
    %v1031 = vmul.f32 %v965, %v997
    %v1032 = vmul.f32 %v966, %v997
    %v1033 = vmul.f32 %v967, %v997
    %v1034 = vmul.f32 %v968, %v997
    %v1035 = vmul.f32 %v969, %v997
    %v1036 = vmul.f32 %v970, %v997
    %v1037 = vmul.f32 %v971, %v997
    %v1038 = vmul.f32 %v972, %v997
    %v1039 = vmul.f32 %v973, %v997
    %v1040 = vmul.f32 %v974, %v997
    %v1041 = vmul.f32 %v975, %v997
    %v1042 = vmul.f32 %v976, %v997
    %v1043 = vmul.f32 %v977, %v997
    %v1044 = vmul.f32 %v978, %v997
    %v1045 = vmul.f32 %v979, %v997
    %v1046 = vmul.f32 %v980, %v997
    %v1047 = vmul.f32 %v981, %v997
    %v1048 = vmul.f32 %v982, %v997
    %v1049 = vmul.f32 %v983, %v997
    %v1050 = vmul.f32 %v984, %v997
    %v1051 = vmul.f32 %v985, %v997
    %v1052 = vmul.f32 %v986, %v997
    %v1053 = vmul.f32 %v987, %v997
    %v1054 = vmul.f32 %v988, %v997
    %v1055 = vmul.f32 %v989, %v997
    %v1056 = vmul.f32 %v990, %v997
    %v1057 = vmul.f32 %v991, %v997
    %v1058 = vmul.f32 %v992, %v997
    %v1059 = vmul.f32 %v993, %v997
    %v1060 = vmul.f32 %v994, %v997
    %v1061 = vmul.f32 %v995, %v997
    %v1062 = vmul.f32 %v998, 1.442695
    %v1063 = vpow.pop %v1062
    %v1064 = vmul.f32 %v999, 1.442695
    %v1065 = vpow.pop %v1064
    %v1066 = vmul.f32 %v1000, 1.442695
    %v1067 = vpow.pop %v1066
    %v1068 = vmul.f32 %v1001, 1.442695
    %v1069 = vpow.pop %v1068
    %v1070 = vmul.f32 %v1002, 1.442695
    %v1071 = vpow.pop %v1070
    %v1072 = vmul.f32 %v1003, 1.442695
    %v1073 = vpow.pop %v1072
    %v1074 = vmul.f32 %v1004, 1.442695
    %v1075 = vpow.pop %v1074
    %v1076 = vmul.f32 %v1005, 1.442695
    %v1077 = vpow.pop %v1076
    %v1078 = vmul.f32 %v1006, 1.442695
    %v1079 = vpow.pop %v1078
    %v1080 = vmul.f32 %v1007, 1.442695
    %v1081 = vpow.pop %v1080
    %v1082 = vmul.f32 %v1008, 1.442695
    %v1083 = vpow.pop %v1082
    %v1084 = vmul.f32 %v1009, 1.442695
    %v1085 = vpow.pop %v1084
    %v1086 = vmul.f32 %v1010, 1.442695
    %v1087 = vpow.pop %v1086
    %v1088 = vmul.f32 %v1011, 1.442695
    %v1089 = vpow.pop %v1088
    %v1090 = vmul.f32 %v1012, 1.442695
    %v1091 = vpow.pop %v1090
    %v1092 = vmul.f32 %v1013, 1.442695
    %v1093 = vpow.pop %v1092
    %v1094 = vmul.f32 %v1014, 1.442695
    %v1095 = vpow.pop %v1094
    %v1096 = vmul.f32 %v1015, 1.442695
    %v1097 = vpow.pop %v1096
    %v1098 = vmul.f32 %v1016, 1.442695
    %v1099 = vpow.pop %v1098
    %v1100 = vmul.f32 %v1017, 1.442695
    %v1101 = vpow.pop %v1100
    %v1102 = vmul.f32 %v1018, 1.442695
    %v1103 = vpow.pop %v1102
    %v1104 = vmul.f32 %v1019, 1.442695
    %v1105 = vpow.pop %v1104
    %v1106 = vmul.f32 %v1020, 1.442695
    %v1107 = vpow.pop %v1106
    %v1108 = vmul.f32 %v1021, 1.442695
    %v1109 = vpow.pop %v1108
    %v1110 = vmul.f32 %v1022, 1.442695
    %v1111 = vpow.pop %v1110
    %v1112 = vmul.f32 %v1023, 1.442695
    %v1113 = vpow.pop %v1112
    %v1114 = vmul.f32 %v1024, 1.442695
    %v1115 = vpow.pop %v1114
    %v1116 = vmul.f32 %v1025, 1.442695
    %v1117 = vpow.pop %v1116
    %v1118 = vmul.f32 %v1026, 1.442695
    %v1119 = vpow.pop %v1118
    %v1120 = vmul.f32 %v1027, 1.442695
    %v1121 = vpow.pop %v1120
    %v1122 = vmul.f32 %v1028, 1.442695
    %v1123 = vpow.pop %v1122
    %v1124 = vmul.f32 %v1029, 1.442695
    %v1125 = vpow.pop %v1124
    %v1126 = vmul.f32 %v1030, 1.442695
    %v1127 = vpow.pop %v1126
    %v1128 = vmul.f32 %v1031, 1.442695
    %v1129 = vpow.pop %v1128
    %v1130 = vmul.f32 %v1032, 1.442695
    %v1131 = vpow.pop %v1130
    %v1132 = vmul.f32 %v1033, 1.442695
    %v1133 = vpow.pop %v1132
    %v1134 = vmul.f32 %v1034, 1.442695
    %v1135 = vpow.pop %v1134
    %v1136 = vmul.f32 %v1035, 1.442695
    %v1137 = vpow.pop %v1136
    %v1138 = vmul.f32 %v1036, 1.442695
    %v1139 = vpow.pop %v1138
    %v1140 = vmul.f32 %v1037, 1.442695
    %v1141 = vpow.pop %v1140
    %v1142 = vmul.f32 %v1038, 1.442695
    %v1143 = vpow.pop %v1142
    %v1144 = vmul.f32 %v1039, 1.442695
    %v1145 = vpow.pop %v1144
    %v1146 = vmul.f32 %v1040, 1.442695
    %v1147 = vpow.pop %v1146
    %v1148 = vmul.f32 %v1041, 1.442695
    %v1149 = vpow.pop %v1148
    %v1150 = vmul.f32 %v1042, 1.442695
    %v1151 = vpow.pop %v1150
    %v1152 = vmul.f32 %v1043, 1.442695
    %v1153 = vpow.pop %v1152
    %v1154 = vmul.f32 %v1044, 1.442695
    %v1155 = vpow.pop %v1154
    %v1156 = vmul.f32 %v1045, 1.442695
    %v1157 = vpow.pop %v1156
    %v1158 = vmul.f32 %v1046, 1.442695
    %v1159 = vpow.pop %v1158
    %v1160 = vmul.f32 %v1047, 1.442695
    %v1161 = vpow.pop %v1160
    %v1162 = vmul.f32 %v1048, 1.442695
    %v1163 = vpow.pop %v1162
    %v1164 = vmul.f32 %v1049, 1.442695
    %v1165 = vpow.pop %v1164
    %v1166 = vmul.f32 %v1050, 1.442695
    %v1167 = vpow.pop %v1166
    %v1168 = vmul.f32 %v1051, 1.442695
    %v1169 = vpow.pop %v1168
    %v1170 = vmul.f32 %v1052, 1.442695
    %v1171 = vpow.pop %v1170
    %v1172 = vmul.f32 %v1053, 1.442695
    %v1173 = vpow.pop %v1172
    %v1174 = vmul.f32 %v1054, 1.442695
    %v1175 = vpow.pop %v1174
    %v1176 = vmul.f32 %v1055, 1.442695
    %v1177 = vpow.pop %v1176
    %v1178 = vmul.f32 %v1056, 1.442695
    %v1179 = vpow.pop %v1178
    %v1180 = vmul.f32 %v1057, 1.442695
    %v1181 = vpow.pop %v1180
    %v1182 = vmul.f32 %v1058, 1.442695
    %v1183 = vpow.pop %v1182
    %v1184 = vmul.f32 %v1059, 1.442695
    %v1185 = vpow.pop %v1184
    %v1186 = vmul.f32 %v1060, 1.442695
    %v1187 = vpow.pop %v1186
    %v1188 = vmul.f32 %v1061, 1.442695
    %v1189 = vpow.pop %v1188
    %v1190 = vmul.f32 %v1063, %v1063
    %v1191 = vmul.f32 %v1065, %v1065
    %v1192 = vmul.f32 %v1067, %v1067
    %v1193 = vmul.f32 %v1069, %v1069
    %v1194 = vmul.f32 %v1071, %v1071
    %v1195 = vmul.f32 %v1073, %v1073
    %v1196 = vmul.f32 %v1075, %v1075
    %v1197 = vmul.f32 %v1077, %v1077
    %v1198 = vmul.f32 %v1079, %v1079
    %v1199 = vmul.f32 %v1081, %v1081
    %v1200 = vmul.f32 %v1083, %v1083
    %v1201 = vmul.f32 %v1085, %v1085
    %v1202 = vmul.f32 %v1087, %v1087
    %v1203 = vmul.f32 %v1089, %v1089
    %v1204 = vmul.f32 %v1091, %v1091
    %v1205 = vmul.f32 %v1093, %v1093
    %v1206 = vmul.f32 %v1095, %v1095
    %v1207 = vmul.f32 %v1097, %v1097
    %v1208 = vmul.f32 %v1099, %v1099
    %v1209 = vmul.f32 %v1101, %v1101
    %v1210 = vmul.f32 %v1103, %v1103
    %v1211 = vmul.f32 %v1105, %v1105
    %v1212 = vmul.f32 %v1107, %v1107
    %v1213 = vmul.f32 %v1109, %v1109
    %v1214 = vmul.f32 %v1111, %v1111
    %v1215 = vmul.f32 %v1113, %v1113
    %v1216 = vmul.f32 %v1115, %v1115
    %v1217 = vmul.f32 %v1117, %v1117
    %v1218 = vmul.f32 %v1119, %v1119
    %v1219 = vmul.f32 %v1121, %v1121
    %v1220 = vmul.f32 %v1123, %v1123
    %v1221 = vmul.f32 %v1125, %v1125
    %v1222 = vmul.f32 %v1127, %v1127
    %v1223 = vmul.f32 %v1129, %v1129
    %v1224 = vmul.f32 %v1131, %v1131
    %v1225 = vmul.f32 %v1133, %v1133
    %v1226 = vmul.f32 %v1135, %v1135
    %v1227 = vmul.f32 %v1137, %v1137
    %v1228 = vmul.f32 %v1139, %v1139
    %v1229 = vmul.f32 %v1141, %v1141
    %v1230 = vmul.f32 %v1143, %v1143
    %v1231 = vmul.f32 %v1145, %v1145
    %v1232 = vmul.f32 %v1147, %v1147
    %v1233 = vmul.f32 %v1149, %v1149
    %v1234 = vmul.f32 %v1151, %v1151
    %v1235 = vmul.f32 %v1153, %v1153
    %v1236 = vmul.f32 %v1155, %v1155
    %v1237 = vmul.f32 %v1157, %v1157
    %v1238 = vmul.f32 %v1159, %v1159
    %v1239 = vmul.f32 %v1161, %v1161
    %v1240 = vmul.f32 %v1163, %v1163
    %v1241 = vmul.f32 %v1165, %v1165
    %v1242 = vmul.f32 %v1167, %v1167
    %v1243 = vmul.f32 %v1169, %v1169
    %v1244 = vmul.f32 %v1171, %v1171
    %v1245 = vmul.f32 %v1173, %v1173
    %v1246 = vmul.f32 %v1175, %v1175
    %v1247 = vmul.f32 %v1177, %v1177
    %v1248 = vmul.f32 %v1179, %v1179
    %v1249 = vmul.f32 %v1181, %v1181
    %v1250 = vmul.f32 %v1183, %v1183
    %v1251 = vmul.f32 %v1185, %v1185
    %v1252 = vmul.f32 %v1187, %v1187
    %v1253 = vmul.f32 %v1189, %v1189
    %v1254 = vadd.f32 %v1063, %v1190
    %v1255 = vadd.f32 %v1065, %v1191
    %v1256 = vadd.f32 %v1067, %v1192
    %v1257 = vadd.f32 %v1069, %v1193
    %v1258 = vadd.f32 %v1071, %v1194
    %v1259 = vadd.f32 %v1073, %v1195
    %v1260 = vadd.f32 %v1075, %v1196
    %v1261 = vadd.f32 %v1077, %v1197
    %v1262 = vadd.f32 %v1079, %v1198
    %v1263 = vadd.f32 %v1081, %v1199
    %v1264 = vadd.f32 %v1083, %v1200
    %v1265 = vadd.f32 %v1085, %v1201
    %v1266 = vadd.f32 %v1087, %v1202
    %v1267 = vadd.f32 %v1089, %v1203
    %v1268 = vadd.f32 %v1091, %v1204
    %v1269 = vadd.f32 %v1093, %v1205
    %v1270 = vadd.f32 %v1095, %v1206
    %v1271 = vadd.f32 %v1097, %v1207
    %v1272 = vadd.f32 %v1099, %v1208
    %v1273 = vadd.f32 %v1101, %v1209
    %v1274 = vadd.f32 %v1103, %v1210
    %v1275 = vadd.f32 %v1105, %v1211
    %v1276 = vadd.f32 %v1107, %v1212
    %v1277 = vadd.f32 %v1109, %v1213
    %v1278 = vadd.f32 %v1111, %v1214
    %v1279 = vadd.f32 %v1113, %v1215
    %v1280 = vadd.f32 %v1115, %v1216
    %v1281 = vadd.f32 %v1117, %v1217
    %v1282 = vadd.f32 %v1119, %v1218
    %v1283 = vadd.f32 %v1121, %v1219
    %v1284 = vadd.f32 %v1123, %v1220
    %v1285 = vadd.f32 %v1125, %v1221
    %v1286 = vadd.f32 %v1127, %v1222
    %v1287 = vadd.f32 %v1129, %v1223
    %v1288 = vadd.f32 %v1131, %v1224
    %v1289 = vadd.f32 %v1133, %v1225
    %v1290 = vadd.f32 %v1135, %v1226
    %v1291 = vadd.f32 %v1137, %v1227
    %v1292 = vadd.f32 %v1139, %v1228
    %v1293 = vadd.f32 %v1141, %v1229
    %v1294 = vadd.f32 %v1143, %v1230
    %v1295 = vadd.f32 %v1145, %v1231
    %v1296 = vadd.f32 %v1147, %v1232
    %v1297 = vadd.f32 %v1149, %v1233
    %v1298 = vadd.f32 %v1151, %v1234
    %v1299 = vadd.f32 %v1153, %v1235
    %v1300 = vadd.f32 %v1155, %v1236
    %v1301 = vadd.f32 %v1157, %v1237
    %v1302 = vadd.f32 %v1159, %v1238
    %v1303 = vadd.f32 %v1161, %v1239
    %v1304 = vadd.f32 %v1163, %v1240
    %v1305 = vadd.f32 %v1165, %v1241
    %v1306 = vadd.f32 %v1167, %v1242
    %v1307 = vadd.f32 %v1169, %v1243
    %v1308 = vadd.f32 %v1171, %v1244
    %v1309 = vadd.f32 %v1173, %v1245
    %v1310 = vadd.f32 %v1175, %v1246
    %v1311 = vadd.f32 %v1177, %v1247
    %v1312 = vadd.f32 %v1179, %v1248
    %v1313 = vadd.f32 %v1181, %v1249
    %v1314 = vadd.f32 %v1183, %v1250
    %v1315 = vadd.f32 %v1185, %v1251
    %v1316 = vadd.f32 %v1187, %v1252
    %v1317 = vadd.f32 %v1189, %v1253
    %v1318 = vmul.f32 %v1190, %v1190
    %v1319 = vmul.f32 %v1191, %v1191
    %v1320 = vmul.f32 %v1192, %v1192
    %v1321 = vmul.f32 %v1193, %v1193
    %v1322 = vmul.f32 %v1194, %v1194
    %v1323 = vmul.f32 %v1195, %v1195
    %v1324 = vmul.f32 %v1196, %v1196
    %v1325 = vmul.f32 %v1197, %v1197
    %v1326 = vmul.f32 %v1198, %v1198
    %v1327 = vmul.f32 %v1199, %v1199
    %v1328 = vmul.f32 %v1200, %v1200
    %v1329 = vmul.f32 %v1201, %v1201
    %v1330 = vmul.f32 %v1202, %v1202
    %v1331 = vmul.f32 %v1203, %v1203
    %v1332 = vmul.f32 %v1204, %v1204
    %v1333 = vmul.f32 %v1205, %v1205
    %v1334 = vmul.f32 %v1206, %v1206
    %v1335 = vmul.f32 %v1207, %v1207
    %v1336 = vmul.f32 %v1208, %v1208
    %v1337 = vmul.f32 %v1209, %v1209
    %v1338 = vmul.f32 %v1210, %v1210
    %v1339 = vmul.f32 %v1211, %v1211
    %v1340 = vmul.f32 %v1212, %v1212
    %v1341 = vmul.f32 %v1213, %v1213
    %v1342 = vmul.f32 %v1214, %v1214
    %v1343 = vmul.f32 %v1215, %v1215
    %v1344 = vmul.f32 %v1216, %v1216
    %v1345 = vmul.f32 %v1217, %v1217
    %v1346 = vmul.f32 %v1218, %v1218
    %v1347 = vmul.f32 %v1219, %v1219
    %v1348 = vmul.f32 %v1220, %v1220
    %v1349 = vmul.f32 %v1221, %v1221
    %v1350 = vmul.f32 %v1222, %v1222
    %v1351 = vmul.f32 %v1223, %v1223
    %v1352 = vmul.f32 %v1224, %v1224
    %v1353 = vmul.f32 %v1225, %v1225
    %v1354 = vmul.f32 %v1226, %v1226
    %v1355 = vmul.f32 %v1227, %v1227
    %v1356 = vmul.f32 %v1228, %v1228
    %v1357 = vmul.f32 %v1229, %v1229
    %v1358 = vmul.f32 %v1230, %v1230
    %v1359 = vmul.f32 %v1231, %v1231
    %v1360 = vmul.f32 %v1232, %v1232
    %v1361 = vmul.f32 %v1233, %v1233
    %v1362 = vmul.f32 %v1234, %v1234
    %v1363 = vmul.f32 %v1235, %v1235
    %v1364 = vmul.f32 %v1236, %v1236
    %v1365 = vmul.f32 %v1237, %v1237
    %v1366 = vmul.f32 %v1238, %v1238
    %v1367 = vmul.f32 %v1239, %v1239
    %v1368 = vmul.f32 %v1240, %v1240
    %v1369 = vmul.f32 %v1241, %v1241
    %v1370 = vmul.f32 %v1242, %v1242
    %v1371 = vmul.f32 %v1243, %v1243
    %v1372 = vmul.f32 %v1244, %v1244
    %v1373 = vmul.f32 %v1245, %v1245
    %v1374 = vmul.f32 %v1246, %v1246
    %v1375 = vmul.f32 %v1247, %v1247
    %v1376 = vmul.f32 %v1248, %v1248
    %v1377 = vmul.f32 %v1249, %v1249
    %v1378 = vmul.f32 %v1250, %v1250
    %v1379 = vmul.f32 %v1251, %v1251
    %v1380 = vmul.f32 %v1252, %v1252
    %v1381 = vmul.f32 %v1253, %v1253
    %v1382 = vadd.f32 %v1254, %v1318
    %v1383 = vadd.f32 %v1255, %v1319
    %v1384 = vadd.f32 %v1256, %v1320
    %v1385 = vadd.f32 %v1257, %v1321
    %v1386 = vadd.f32 %v1258, %v1322
    %v1387 = vadd.f32 %v1259, %v1323
    %v1388 = vadd.f32 %v1260, %v1324
    %v1389 = vadd.f32 %v1261, %v1325
    %v1390 = vadd.f32 %v1262, %v1326
    %v1391 = vadd.f32 %v1263, %v1327
    %v1392 = vadd.f32 %v1264, %v1328
    %v1393 = vadd.f32 %v1265, %v1329
    %v1394 = vadd.f32 %v1266, %v1330
    %v1395 = vadd.f32 %v1267, %v1331
    %v1396 = vadd.f32 %v1268, %v1332
    %v1397 = vadd.f32 %v1269, %v1333
    %v1398 = vadd.f32 %v1270, %v1334
    %v1399 = vadd.f32 %v1271, %v1335
    %v1400 = vadd.f32 %v1272, %v1336
    %v1401 = vadd.f32 %v1273, %v1337
    %v1402 = vadd.f32 %v1274, %v1338
    %v1403 = vadd.f32 %v1275, %v1339
    %v1404 = vadd.f32 %v1276, %v1340
    %v1405 = vadd.f32 %v1277, %v1341
    %v1406 = vadd.f32 %v1278, %v1342
    %v1407 = vadd.f32 %v1279, %v1343
    %v1408 = vadd.f32 %v1280, %v1344
    %v1409 = vadd.f32 %v1281, %v1345
    %v1410 = vadd.f32 %v1282, %v1346
    %v1411 = vadd.f32 %v1283, %v1347
    %v1412 = vadd.f32 %v1284, %v1348
    %v1413 = vadd.f32 %v1285, %v1349
    %v1414 = vadd.f32 %v1286, %v1350
    %v1415 = vadd.f32 %v1287, %v1351
    %v1416 = vadd.f32 %v1288, %v1352
    %v1417 = vadd.f32 %v1289, %v1353
    %v1418 = vadd.f32 %v1290, %v1354
    %v1419 = vadd.f32 %v1291, %v1355
    %v1420 = vadd.f32 %v1292, %v1356
    %v1421 = vadd.f32 %v1293, %v1357
    %v1422 = vadd.f32 %v1294, %v1358
    %v1423 = vadd.f32 %v1295, %v1359
    %v1424 = vadd.f32 %v1296, %v1360
    %v1425 = vadd.f32 %v1297, %v1361
    %v1426 = vadd.f32 %v1298, %v1362
    %v1427 = vadd.f32 %v1299, %v1363
    %v1428 = vadd.f32 %v1300, %v1364
    %v1429 = vadd.f32 %v1301, %v1365
    %v1430 = vadd.f32 %v1302, %v1366
    %v1431 = vadd.f32 %v1303, %v1367
    %v1432 = vadd.f32 %v1304, %v1368
    %v1433 = vadd.f32 %v1305, %v1369
    %v1434 = vadd.f32 %v1306, %v1370
    %v1435 = vadd.f32 %v1307, %v1371
    %v1436 = vadd.f32 %v1308, %v1372
    %v1437 = vadd.f32 %v1309, %v1373
    %v1438 = vadd.f32 %v1310, %v1374
    %v1439 = vadd.f32 %v1311, %v1375
    %v1440 = vadd.f32 %v1312, %v1376
    %v1441 = vadd.f32 %v1313, %v1377
    %v1442 = vadd.f32 %v1314, %v1378
    %v1443 = vadd.f32 %v1315, %v1379
    %v1444 = vadd.f32 %v1316, %v1380
    %v1445 = vadd.f32 %v1317, %v1381
    %v1446 = vmul.f32 %v1318, %v1318
    %v1447 = vmul.f32 %v1319, %v1319
    %v1448 = vmul.f32 %v1320, %v1320
    %v1449 = vmul.f32 %v1321, %v1321
    %v1450 = vmul.f32 %v1322, %v1322
    %v1451 = vmul.f32 %v1323, %v1323
    %v1452 = vmul.f32 %v1324, %v1324
    %v1453 = vmul.f32 %v1325, %v1325
    %v1454 = vmul.f32 %v1326, %v1326
    %v1455 = vmul.f32 %v1327, %v1327
    %v1456 = vmul.f32 %v1328, %v1328
    %v1457 = vmul.f32 %v1329, %v1329
    %v1458 = vmul.f32 %v1330, %v1330
    %v1459 = vmul.f32 %v1331, %v1331
    %v1460 = vmul.f32 %v1332, %v1332
    %v1461 = vmul.f32 %v1333, %v1333
    %v1462 = vmul.f32 %v1334, %v1334
    %v1463 = vmul.f32 %v1335, %v1335
    %v1464 = vmul.f32 %v1336, %v1336
    %v1465 = vmul.f32 %v1337, %v1337
    %v1466 = vmul.f32 %v1338, %v1338
    %v1467 = vmul.f32 %v1339, %v1339
    %v1468 = vmul.f32 %v1340, %v1340
    %v1469 = vmul.f32 %v1341, %v1341
    %v1470 = vmul.f32 %v1342, %v1342
    %v1471 = vmul.f32 %v1343, %v1343
    %v1472 = vmul.f32 %v1344, %v1344
    %v1473 = vmul.f32 %v1345, %v1345
    %v1474 = vmul.f32 %v1346, %v1346
    %v1475 = vmul.f32 %v1347, %v1347
    %v1476 = vmul.f32 %v1348, %v1348
    %v1477 = vmul.f32 %v1349, %v1349
    %v1478 = vmul.f32 %v1350, %v1350
    %v1479 = vmul.f32 %v1351, %v1351
    %v1480 = vmul.f32 %v1352, %v1352
    %v1481 = vmul.f32 %v1353, %v1353
    %v1482 = vmul.f32 %v1354, %v1354
    %v1483 = vmul.f32 %v1355, %v1355
    %v1484 = vmul.f32 %v1356, %v1356
    %v1485 = vmul.f32 %v1357, %v1357
    %v1486 = vmul.f32 %v1358, %v1358
    %v1487 = vmul.f32 %v1359, %v1359
    %v1488 = vmul.f32 %v1360, %v1360
    %v1489 = vmul.f32 %v1361, %v1361
    %v1490 = vmul.f32 %v1362, %v1362
    %v1491 = vmul.f32 %v1363, %v1363
    %v1492 = vmul.f32 %v1364, %v1364
    %v1493 = vmul.f32 %v1365, %v1365
    %v1494 = vmul.f32 %v1366, %v1366
    %v1495 = vmul.f32 %v1367, %v1367
    %v1496 = vmul.f32 %v1368, %v1368
    %v1497 = vmul.f32 %v1369, %v1369
    %v1498 = vmul.f32 %v1370, %v1370
    %v1499 = vmul.f32 %v1371, %v1371
    %v1500 = vmul.f32 %v1372, %v1372
    %v1501 = vmul.f32 %v1373, %v1373
    %v1502 = vmul.f32 %v1374, %v1374
    %v1503 = vmul.f32 %v1375, %v1375
    %v1504 = vmul.f32 %v1376, %v1376
    %v1505 = vmul.f32 %v1377, %v1377
    %v1506 = vmul.f32 %v1378, %v1378
    %v1507 = vmul.f32 %v1379, %v1379
    %v1508 = vmul.f32 %v1380, %v1380
    %v1509 = vmul.f32 %v1381, %v1381
    %v1510 = vadd.f32 %v1382, %v1446
    %v1511 = vadd.f32 %v1383, %v1447
    %v1512 = vadd.f32 %v1384, %v1448
    %v1513 = vadd.f32 %v1385, %v1449
    %v1514 = vadd.f32 %v1386, %v1450
    %v1515 = vadd.f32 %v1387, %v1451
    %v1516 = vadd.f32 %v1388, %v1452
    %v1517 = vadd.f32 %v1389, %v1453
    %v1518 = vadd.f32 %v1390, %v1454
    %v1519 = vadd.f32 %v1391, %v1455
    %v1520 = vadd.f32 %v1392, %v1456
    %v1521 = vadd.f32 %v1393, %v1457
    %v1522 = vadd.f32 %v1394, %v1458
    %v1523 = vadd.f32 %v1395, %v1459
    %v1524 = vadd.f32 %v1396, %v1460
    %v1525 = vadd.f32 %v1397, %v1461
    %v1526 = vadd.f32 %v1398, %v1462
    %v1527 = vadd.f32 %v1399, %v1463
    %v1528 = vadd.f32 %v1400, %v1464
    %v1529 = vadd.f32 %v1401, %v1465
    %v1530 = vadd.f32 %v1402, %v1466
    %v1531 = vadd.f32 %v1403, %v1467
    %v1532 = vadd.f32 %v1404, %v1468
    %v1533 = vadd.f32 %v1405, %v1469
    %v1534 = vadd.f32 %v1406, %v1470
    %v1535 = vadd.f32 %v1407, %v1471
    %v1536 = vadd.f32 %v1408, %v1472
    %v1537 = vadd.f32 %v1409, %v1473
    %v1538 = vadd.f32 %v1410, %v1474
    %v1539 = vadd.f32 %v1411, %v1475
    %v1540 = vadd.f32 %v1412, %v1476
    %v1541 = vadd.f32 %v1413, %v1477
    %v1542 = vadd.f32 %v1414, %v1478
    %v1543 = vadd.f32 %v1415, %v1479
    %v1544 = vadd.f32 %v1416, %v1480
    %v1545 = vadd.f32 %v1417, %v1481
    %v1546 = vadd.f32 %v1418, %v1482
    %v1547 = vadd.f32 %v1419, %v1483
    %v1548 = vadd.f32 %v1420, %v1484
    %v1549 = vadd.f32 %v1421, %v1485
    %v1550 = vadd.f32 %v1422, %v1486
    %v1551 = vadd.f32 %v1423, %v1487
    %v1552 = vadd.f32 %v1424, %v1488
    %v1553 = vadd.f32 %v1425, %v1489
    %v1554 = vadd.f32 %v1426, %v1490
    %v1555 = vadd.f32 %v1427, %v1491
    %v1556 = vadd.f32 %v1428, %v1492
    %v1557 = vadd.f32 %v1429, %v1493
    %v1558 = vadd.f32 %v1430, %v1494
    %v1559 = vadd.f32 %v1431, %v1495
    %v1560 = vadd.f32 %v1432, %v1496
    %v1561 = vadd.f32 %v1433, %v1497
    %v1562 = vadd.f32 %v1434, %v1498
    %v1563 = vadd.f32 %v1435, %v1499
    %v1564 = vadd.f32 %v1436, %v1500
    %v1565 = vadd.f32 %v1437, %v1501
    %v1566 = vadd.f32 %v1438, %v1502
    %v1567 = vadd.f32 %v1439, %v1503
    %v1568 = vadd.f32 %v1440, %v1504
    %v1569 = vadd.f32 %v1441, %v1505
    %v1570 = vadd.f32 %v1442, %v1506
    %v1571 = vadd.f32 %v1443, %v1507
    %v1572 = vadd.f32 %v1444, %v1508
    %v1573 = vadd.f32 %v1445, %v1509
    %v1574 = vmul.f32 %v1446, %v1446
    %v1575 = vmul.f32 %v1447, %v1447
    %v1576 = vmul.f32 %v1448, %v1448
    %v1577 = vmul.f32 %v1449, %v1449
    %v1578 = vmul.f32 %v1450, %v1450
    %v1579 = vmul.f32 %v1451, %v1451
    %v1580 = vmul.f32 %v1452, %v1452
    %v1581 = vmul.f32 %v1453, %v1453
    %v1582 = vmul.f32 %v1454, %v1454
    %v1583 = vmul.f32 %v1455, %v1455
    %v1584 = vmul.f32 %v1456, %v1456
    %v1585 = vmul.f32 %v1457, %v1457
    %v1586 = vmul.f32 %v1458, %v1458
    %v1587 = vmul.f32 %v1459, %v1459
    %v1588 = vmul.f32 %v1460, %v1460
    %v1589 = vmul.f32 %v1461, %v1461
    %v1590 = vmul.f32 %v1462, %v1462
    %v1591 = vmul.f32 %v1463, %v1463
    %v1592 = vmul.f32 %v1464, %v1464
    %v1593 = vmul.f32 %v1465, %v1465
    %v1594 = vmul.f32 %v1466, %v1466
    %v1595 = vmul.f32 %v1467, %v1467
    %v1596 = vmul.f32 %v1468, %v1468
    %v1597 = vmul.f32 %v1469, %v1469
    %v1598 = vmul.f32 %v1470, %v1470
    %v1599 = vmul.f32 %v1471, %v1471
    %v1600 = vmul.f32 %v1472, %v1472
    %v1601 = vmul.f32 %v1473, %v1473
    %v1602 = vmul.f32 %v1474, %v1474
    %v1603 = vmul.f32 %v1475, %v1475
    %v1604 = vmul.f32 %v1476, %v1476
    %v1605 = vmul.f32 %v1477, %v1477
    %v1606 = vmul.f32 %v1478, %v1478
    %v1607 = vmul.f32 %v1479, %v1479
    %v1608 = vmul.f32 %v1480, %v1480
    %v1609 = vmul.f32 %v1481, %v1481
    %v1610 = vmul.f32 %v1482, %v1482
    %v1611 = vmul.f32 %v1483, %v1483
    %v1612 = vmul.f32 %v1484, %v1484
    %v1613 = vmul.f32 %v1485, %v1485
    %v1614 = vmul.f32 %v1486, %v1486
    %v1615 = vmul.f32 %v1487, %v1487
    %v1616 = vmul.f32 %v1488, %v1488
    %v1617 = vmul.f32 %v1489, %v1489
    %v1618 = vmul.f32 %v1490, %v1490
    %v1619 = vmul.f32 %v1491, %v1491
    %v1620 = vmul.f32 %v1492, %v1492
    %v1621 = vmul.f32 %v1493, %v1493
    %v1622 = vmul.f32 %v1494, %v1494
    %v1623 = vmul.f32 %v1495, %v1495
    %v1624 = vmul.f32 %v1496, %v1496
    %v1625 = vmul.f32 %v1497, %v1497
    %v1626 = vmul.f32 %v1498, %v1498
    %v1627 = vmul.f32 %v1499, %v1499
    %v1628 = vmul.f32 %v1500, %v1500
    %v1629 = vmul.f32 %v1501, %v1501
    %v1630 = vmul.f32 %v1502, %v1502
    %v1631 = vmul.f32 %v1503, %v1503
    %v1632 = vmul.f32 %v1504, %v1504
    %v1633 = vmul.f32 %v1505, %v1505
    %v1634 = vmul.f32 %v1506, %v1506
    %v1635 = vmul.f32 %v1507, %v1507
    %v1636 = vmul.f32 %v1508, %v1508
    %v1637 = vmul.f32 %v1509, %v1509
    %v1638 = vadd.f32 %v1510, %v1574
    %v1639 = vadd.f32 %v1511, %v1575
    %v1640 = vadd.f32 %v1512, %v1576
    %v1641 = vadd.f32 %v1513, %v1577
    %v1642 = vadd.f32 %v1514, %v1578
    %v1643 = vadd.f32 %v1515, %v1579
    %v1644 = vadd.f32 %v1516, %v1580
    %v1645 = vadd.f32 %v1517, %v1581
    %v1646 = vadd.f32 %v1518, %v1582
    %v1647 = vadd.f32 %v1519, %v1583
    %v1648 = vadd.f32 %v1520, %v1584
    %v1649 = vadd.f32 %v1521, %v1585
    %v1650 = vadd.f32 %v1522, %v1586
    %v1651 = vadd.f32 %v1523, %v1587
    %v1652 = vadd.f32 %v1524, %v1588
    %v1653 = vadd.f32 %v1525, %v1589
    %v1654 = vadd.f32 %v1526, %v1590
    %v1655 = vadd.f32 %v1527, %v1591
    %v1656 = vadd.f32 %v1528, %v1592
    %v1657 = vadd.f32 %v1529, %v1593
    %v1658 = vadd.f32 %v1530, %v1594
    %v1659 = vadd.f32 %v1531, %v1595
    %v1660 = vadd.f32 %v1532, %v1596
    %v1661 = vadd.f32 %v1533, %v1597
    %v1662 = vadd.f32 %v1534, %v1598
    %v1663 = vadd.f32 %v1535, %v1599
    %v1664 = vadd.f32 %v1536, %v1600
    %v1665 = vadd.f32 %v1537, %v1601
    %v1666 = vadd.f32 %v1538, %v1602
    %v1667 = vadd.f32 %v1539, %v1603
    %v1668 = vadd.f32 %v1540, %v1604
    %v1669 = vadd.f32 %v1541, %v1605
    %v1670 = vadd.f32 %v1542, %v1606
    %v1671 = vadd.f32 %v1543, %v1607
    %v1672 = vadd.f32 %v1544, %v1608
    %v1673 = vadd.f32 %v1545, %v1609
    %v1674 = vadd.f32 %v1546, %v1610
    %v1675 = vadd.f32 %v1547, %v1611
    %v1676 = vadd.f32 %v1548, %v1612
    %v1677 = vadd.f32 %v1549, %v1613
    %v1678 = vadd.f32 %v1550, %v1614
    %v1679 = vadd.f32 %v1551, %v1615
    %v1680 = vadd.f32 %v1552, %v1616
    %v1681 = vadd.f32 %v1553, %v1617
    %v1682 = vadd.f32 %v1554, %v1618
    %v1683 = vadd.f32 %v1555, %v1619
    %v1684 = vadd.f32 %v1556, %v1620
    %v1685 = vadd.f32 %v1557, %v1621
    %v1686 = vadd.f32 %v1558, %v1622
    %v1687 = vadd.f32 %v1559, %v1623
    %v1688 = vadd.f32 %v1560, %v1624
    %v1689 = vadd.f32 %v1561, %v1625
    %v1690 = vadd.f32 %v1562, %v1626
    %v1691 = vadd.f32 %v1563, %v1627
    %v1692 = vadd.f32 %v1564, %v1628
    %v1693 = vadd.f32 %v1565, %v1629
    %v1694 = vadd.f32 %v1566, %v1630
    %v1695 = vadd.f32 %v1567, %v1631
    %v1696 = vadd.f32 %v1568, %v1632
    %v1697 = vadd.f32 %v1569, %v1633
    %v1698 = vadd.f32 %v1570, %v1634
    %v1699 = vadd.f32 %v1571, %v1635
    %v1700 = vadd.f32 %v1572, %v1636
    %v1701 = vadd.f32 %v1573, %v1637
    %1702 = vst [vmem:[#allocation3] sm:$0xff] %v1638
    %1703 = vst [vmem:[#allocation3 + $0x8] sm:$0xff] %v1639
    %1704 = vst [vmem:[#allocation3 + $0x10] sm:$0xff] %v1640
    %1705 = vst [vmem:[#allocation3 + $0x18] sm:$0xff] %v1641
    %1706 = vst [vmem:[#allocation3 + $0x20] sm:$0xff] %v1642
    %1707 = vst [vmem:[#allocation3 + $0x28] sm:$0xff] %v1643
    %1708 = vst [vmem:[#allocation3 + $0x30] sm:$0xff] %v1644
    %1709 = vst [vmem:[#allocation3 + $0x38] sm:$0xff] %v1645
    %1710 = vst [vmem:[#allocation3 + $0x40] sm:$0xff] %v1646
    %1711 = vst [vmem:[#allocation3 + $0x48] sm:$0xff] %v1647
    %1712 = vst [vmem:[#allocation3 + $0x50] sm:$0xff] %v1648
    %1713 = vst [vmem:[#allocation3 + $0x58] sm:$0xff] %v1649
    %1714 = vst [vmem:[#allocation3 + $0x60] sm:$0xff] %v1650
    %1715 = vst [vmem:[#allocation3 + $0x68] sm:$0xff] %v1651
    %1716 = vst [vmem:[#allocation3 + $0x70] sm:$0xff] %v1652
    %1717 = vst [vmem:[#allocation3 + $0x78] sm:$0xff] %v1653
    %1718 = vst [vmem:[#allocation3 + $0x80] sm:$0xff] %v1654
    %1719 = vst [vmem:[#allocation3 + $0x88] sm:$0xff] %v1655
    %1720 = vst [vmem:[#allocation3 + $0x90] sm:$0xff] %v1656
    %1721 = vst [vmem:[#allocation3 + $0x98] sm:$0xff] %v1657
    %1722 = vst [vmem:[#allocation3 + $0xa0] sm:$0xff] %v1658
    %1723 = vst [vmem:[#allocation3 + $0xa8] sm:$0xff] %v1659
    %1724 = vst [vmem:[#allocation3 + $0xb0] sm:$0xff] %v1660
    %1725 = vst [vmem:[#allocation3 + $0xb8] sm:$0xff] %v1661
    %1726 = vst [vmem:[#allocation3 + $0xc0] sm:$0xff] %v1662
    %1727 = vst [vmem:[#allocation3 + $0xc8] sm:$0xff] %v1663
    %1728 = vst [vmem:[#allocation3 + $0xd0] sm:$0xff] %v1664
    %1729 = vst [vmem:[#allocation3 + $0xd8] sm:$0xff] %v1665
    %1730 = vst [vmem:[#allocation3 + $0xe0] sm:$0xff] %v1666
    %1731 = vst [vmem:[#allocation3 + $0xe8] sm:$0xff] %v1667
    %1732 = vst [vmem:[#allocation3 + $0xf0] sm:$0xff] %v1668
    %1733 = vst [vmem:[#allocation3 + $0xf8] sm:$0xff] %v1669
    %1734 = vst [vmem:[#allocation3 + $0x100] sm:$0xff] %v1670
    %1735 = vst [vmem:[#allocation3 + $0x108] sm:$0xff] %v1671
    %1736 = vst [vmem:[#allocation3 + $0x110] sm:$0xff] %v1672
    %1737 = vst [vmem:[#allocation3 + $0x118] sm:$0xff] %v1673
    %1738 = vst [vmem:[#allocation3 + $0x120] sm:$0xff] %v1674
    %1739 = vst [vmem:[#allocation3 + $0x128] sm:$0xff] %v1675
    %1740 = vst [vmem:[#allocation3 + $0x130] sm:$0xff] %v1676
    %1741 = vst [vmem:[#allocation3 + $0x138] sm:$0xff] %v1677
    %1742 = vst [vmem:[#allocation3 + $0x140] sm:$0xff] %v1678
    %1743 = vst [vmem:[#allocation3 + $0x148] sm:$0xff] %v1679
    %1744 = vst [vmem:[#allocation3 + $0x150] sm:$0xff] %v1680
    %1745 = vst [vmem:[#allocation3 + $0x158] sm:$0xff] %v1681
    %1746 = vst [vmem:[#allocation3 + $0x160] sm:$0xff] %v1682
    %1747 = vst [vmem:[#allocation3 + $0x168] sm:$0xff] %v1683
    %1748 = vst [vmem:[#allocation3 + $0x170] sm:$0xff] %v1684
    %1749 = vst [vmem:[#allocation3 + $0x178] sm:$0xff] %v1685
    %1750 = vst [vmem:[#allocation3 + $0x180] sm:$0xff] %v1686
    %1751 = vst [vmem:[#allocation3 + $0x188] sm:$0xff] %v1687
    %1752 = vst [vmem:[#allocation3 + $0x190] sm:$0xff] %v1688
    %1753 = vst [vmem:[#allocation3 + $0x198] sm:$0xff] %v1689
    %1754 = vst [vmem:[#allocation3 + $0x1a0] sm:$0xff] %v1690
    %1755 = vst [vmem:[#allocation3 + $0x1a8] sm:$0xff] %v1691
    %1756 = vst [vmem:[#allocation3 + $0x1b0] sm:$0xff] %v1692
    %1757 = vst [vmem:[#allocation3 + $0x1b8] sm:$0xff] %v1693
    %1758 = vst [vmem:[#allocation3 + $0x1c0] sm:$0xff] %v1694
    %1759 = vst [vmem:[#allocation3 + $0x1c8] sm:$0xff] %v1695
    %1760 = vst [vmem:[#allocation3 + $0x1d0] sm:$0xff] %v1696
    %1761 = vst [vmem:[#allocation3 + $0x1d8] sm:$0xff] %v1697
    %1762 = vst [vmem:[#allocation3 + $0x1e0] sm:$0xff] %v1698
    %1763 = vst [vmem:[#allocation3 + $0x1e8] sm:$0xff] %v1699
    %1764 = vst [vmem:[#allocation3 + $0x1f0] sm:$0xff] %v1700
    %1765 = vst [vmem:[#allocation3 + $0x1f8] sm:$0xff] %v1701
    // Predicated region
    $region22: #{tpu_custom_call.1} parent=1 // pred_check
      _
    $region23: #{tpu_custom_call.1} parent=1 // pred_check_branch
      %1767 = sbr.rel (0) target = $region25
    $region24: #{tpu_custom_call.1} parent=1 // pred_region
      %s1769 = ssub.s32 8192, 8192
      %1770 = vsyncadd [#allocation4], %s1769
      %s1771 = sshll.u32 [#allocation3], 4
      %s1772 = int_to_ptr.vmem [resolvable:$true] %s1771
      %1777 = dma.vmem_to_hbm [thread:$0]  %s1772, 8192, %s5, [#allocation4], 256, 256, 16
    $region25: #{tpu_custom_call.1} parent=1 // pred_fallthru
      _
    // Predicated region
    $region26: #{tpu_custom_call.1} parent=1 // pred_check
      _
    $region27: #{tpu_custom_call.1} parent=1 // pred_check_branch
      %1779 = sbr.rel (0) target = $region29
    $region28: #{tpu_custom_call.1} parent=1 // pred_region
      %1780 = dma.done [#allocation4], 8192
    $region29: #{tpu_custom_call.1} parent=1 // pred_fallthru
      _
    %1781 = vsyncpa [#allocation4], 1

</llo_original>
